<compile_context>
chip_gen: v6e
topology: v6e:2x2x1
jax: 0.10.0
libtpu: 0.0.40
codegen_flags: <defaults>
</compile_context>

<pallas_src>
import functools

import jax
import jax.numpy as jnp
from jax import lax
from jax.experimental import pallas as pl
from jax.experimental.pallas import tpu as pltpu  # noqa: F401  (kept for TODOs above)


def _sigmoid(v):
    # logistic via tanh: stays on the EUP, no full-precision divide on the critical path
    return 0.5 * jnp.tanh(0.5 * v) + 0.5


def _bilstm_kernel(ids_ref, wfold_ref, bias_ref, wrec_ref, h0_ref, c0_ref,
                   wout_ref, bout_ref, out_ref, *, T, B, V, H, K):
    f32 = jnp.float32
    G = 2 * H          # fused per-gate width: [gate_fwd | gate_bwd]
    L = 4 * G          # total fused gate lane width (= 8H = 128 for H=16)

    # ---- embedding + input projection fused: ONE lane-dense (T*B, 8H) matmul ----
    ids = ids_ref[...]                                              # (T*B, 1) int32
    vocab_iota = lax.broadcasted_iota(jnp.int32, (T * B, V), 1)
    onehot = (ids == vocab_iota).astype(f32)                        # (T*B, V)
    xg_all = (jnp.dot(onehot, wfold_ref[...], preferred_element_type=f32)
              + bias_ref[...])                                      # (T*B, 8H)

    # constant lane masks, hoisted out of the recurrence
    lane = lax.broadcasted_iota(jnp.int32, (B, L), 1)
    fwd_gate_mask = (lane % G) < H                                  # fwd lanes per gate
    fwd_half_mask = lax.broadcasted_iota(jnp.int32, (B, G), 1) < H  # fwd half of [hf|hb]

    w_rec = wrec_ref[...]                                           # (2H, 8H) block-diag
    h = h0_ref[...]                                                 # (B, 2H) = [h_f|h_b]
    c = c0_ref[...]                                                 # (B, 2H) = [c_f|c_b]

    # ---- fused, fully-unrolled recurrence: one 128-lane matmul per step ----
    hs = []
    for s in range(T):
        r = T - 1 - s
        # fwd gate lanes take time s, bwd gate lanes take time T-1-s
        xg_step = jnp.where(fwd_gate_mask,
                            xg_all[s * B:(s + 1) * B, :],
                            xg_all[r * B:(r + 1) * B, :])           # (B, 8H)
        pre = xg_step + jnp.dot(h, w_rec, preferred_element_type=f32)
        i_pre = pre[:, 0 * G:1 * G]
        f_pre = pre[:, 1 * G:2 * G]
        g_pre = pre[:, 2 * G:3 * G]
        o_pre = pre[:, 3 * G:4 * G]
        c = _sigmoid(f_pre) * c + _sigmoid(i_pre) * jnp.tanh(g_pre)
        h = _sigmoid(o_pre) * jnp.tanh(c)
        hs.append(h)                                                # stays in vregs

    # ---- recombine per-time outputs (fwd half from step t, bwd half from step T-1-t)
    #      and run ONE fused output matmul; output stays 2-D and lane-dense ----
    h_time = [jnp.where(fwd_half_mask, hs[t], hs[T - 1 - t]) for t in range(T)]
    h_all = jnp.concatenate(h_time, axis=0)                         # (T*B, 2H) time-major
    logits = (jnp.dot(h_all, wout_ref[...], preferred_element_type=f32)
              + bout_ref[...])                                      # (T*B, K)
    out_ref[...] = logits


def bilstm_forward(ids_bt, params):
    """ids_bt: (B, T) int32 token ids.  Returns (B, T, tag_size) float32."""
    B, T = ids_bt.shape
    emb = params["embedding"]
    V, E = emb.shape
    H = params["w_hh_f"].shape[1]                 # per-direction hidden size
    K = params["w_lin"].shape[0]
    G = 2 * H
    f32 = jnp.float32

    # --- fold embedding into the input projection: (V, 8H), gate-major / dir-minor ---
    w_in = jnp.stack([params["w_ih_f"].reshape(4, H, E),
                      params["w_ih_b"].reshape(4, H, E)], axis=1)       # (4, 2, H, E)
    w_in = jnp.transpose(w_in, (3, 0, 1, 2)).reshape(E, 4 * G)          # (E, 8H)
    w_fold = emb.astype(f32) @ w_in.astype(f32)                         # (V, 8H)

    b_all = jnp.stack([(params["b_ih_f"] + params["b_hh_f"]).reshape(4, H),
                       (params["b_ih_b"] + params["b_hh_b"]).reshape(4, H)],
                      axis=1).reshape(1, 4 * G)                         # (1, 8H)

    # --- block-diagonal recurrent weight: (2H, 8H) ---
    whf = jnp.transpose(params["w_hh_f"].reshape(4, H, H), (0, 2, 1))   # (4, Hin, Hout)
    whb = jnp.transpose(params["w_hh_b"].reshape(4, H, H), (0, 2, 1))
    z = jnp.zeros_like(whf)
    top = jnp.transpose(jnp.stack([whf, z], axis=1), (2, 0, 1, 3)).reshape(H, 4 * G)
    bot = jnp.transpose(jnp.stack([z, whb], axis=1), (2, 0, 1, 3)).reshape(H, 4 * G)
    w_rec = jnp.concatenate([top, bot], axis=0)                         # (2H, 8H)

    # --- fused output projection weight/bias ---
    w_out = params["w_lin"].T.astype(f32)                               # (2H, K)
    b_out = params["b_lin"].reshape(1, K).astype(f32)                   # (1, K)

    # --- fused initial states: [fwd | bwd] along lanes ---
    h0 = jnp.concatenate([params["h0"][0], params["h0"][1]], axis=1)    # (B, 2H)
    c0 = jnp.concatenate([params["c0"][0], params["c0"][1]], axis=1)    # (B, 2H)

    # time-major flattened ids, row index = t*B + b
    ids_flat = jnp.transpose(ids_bt, (1, 0)).reshape(T * B, 1).astype(jnp.int32)

    out2d = pl.pallas_call(
        functools.partial(_bilstm_kernel, T=T, B=B, V=V, H=H, K=K),
        out_shape=jax.ShapeDtypeStruct((T * B, K), jnp.float32),
    )(ids_flat, w_fold, b_all, w_rec, h0, c0, w_out, b_out)

    # tiny wrapper-side view change: (T*B, K) time-major -> (B, T, K)
    return jnp.transpose(out2d.reshape(T, B, K), (1, 0, 2))


def bilstm_reference(ids_bt, params):
    """Pure-JAX reference mirroring nn.Embedding + nn.LSTM(bidirectional) + nn.Linear."""
    x = params["embedding"][ids_bt]                # (B, T, E)

    def run_dir(wih, whh, bih, bhh, h0, c0, reverse):
        xs = jnp.transpose(x, (1, 0, 2))           # (T, B, E)
        if reverse:
            xs = xs[::-1]

        def step(carry, x_t):
            h, c = carry
            gates = x_t @ wih.T + bih + h @ whh.T + bhh
            i, f, g, o = jnp.split(gates, 4, axis=-1)
            c = jax.nn.sigmoid(f) * c + jax.nn.sigmoid(i) * jnp.tanh(g)
            h = jax.nn.sigmoid(o) * jnp.tanh(c)
            return (h, c), h

        _, hs = lax.scan(step, (h0, c0), xs)
        if reverse:
            hs = hs[::-1]
        return jnp.transpose(hs, (1, 0, 2))        # (B, T, H)

    hf = run_dir(params["w_ih_f"], params["w_hh_f"], params["b_ih_f"],
                 params["b_hh_f"], params["h0"][0], params["c0"][0], False)
    hb = run_dir(params["w_ih_b"], params["w_hh_b"], params["b_ih_b"],
                 params["b_hh_b"], params["h0"][1], params["c0"][1], True)
    out = jnp.concatenate([hf, hb], axis=-1)       # (B, T, 2H)
    return out @ params["w_lin"].T + params["b_lin"]


if __name__ == "__main__":
    # small, module-consistent shapes
    vocab_size = 30
    input_feature_size = 16          # embedding dim E
    hidden_size = 32                 # bidirectional total -> per-direction H = 16
    batch_size = 2
    sentence_length = 8
    tag_to_id = {"O": 0, "B-PER": 1, "I-PER": 2, "B-LOC": 3, "I-LOC": 4}

    B, T, V, E = batch_size, sentence_length, vocab_size, input_feature_size
    H = hidden_size // 2
    K = len(tag_to_id)

    key = jax.random.PRNGKey(0)
    ks = jax.random.split(key, 16)
    lstm_scale = 1.0 / (H ** 0.5)
    lin_scale = 1.0 / (hidden_size ** 0.5)

    def uni(k, shape, s):
        return jax.random.uniform(k, shape, jnp.float32, -s, s)

    params = {
        "embedding": jax.random.normal(ks[0], (V, E), jnp.float32),
        "w_ih_f": uni(ks[1], (4 * H, E), lstm_scale),
        "w_hh_f": uni(ks[2], (4 * H, H), lstm_scale),
        "b_ih_f": uni(ks[3], (4 * H,), lstm_scale),
        "b_hh_f": uni(ks[4], (4 * H,), lstm_scale),
        "w_ih_b": uni(ks[5], (4 * H, E), lstm_scale),
        "w_hh_b": uni(ks[6], (4 * H, H), lstm_scale),
        "b_ih_b": uni(ks[7], (4 * H,), lstm_scale),
        "b_hh_b": uni(ks[8], (4 * H,), lstm_scale),
        "w_lin": uni(ks[9], (K, hidden_size), lin_scale),
        "b_lin": uni(ks[10], (K,), lin_scale),
        # torch.randn(...) initial states, but drawn deterministically here
        "h0": jax.random.normal(ks[11], (2, B, H), jnp.float32),
        "c0": jax.random.normal(ks[12], (2, B, H), jnp.float32),
    }

    ids = jax.random.randint(ks[13], (B, T), 0, V, dtype=jnp.int32)

    out = jax.block_until_ready(bilstm_forward(ids, params))
    ref = jax.block_until_ready(bilstm_reference(ids, params))

    assert out.shape == (B, T, K), out.shape
    assert jnp.allclose(out, ref, atol=5e-2, rtol=5e-2), float(jnp.abs(out - ref).max())
    print("KERNEL_OK")
</pallas_src>

<mosaic_0001>
module attributes {stable_mosaic.version = 11 : i64} {
  func.func @_bilstm_kernel(%arg0: memref<16x1xi32, #tpu.memory_space<vmem>>, %arg1: memref<30x128xf32, #tpu.memory_space<vmem>>, %arg2: memref<1x128xf32, #tpu.memory_space<vmem>>, %arg3: memref<32x128xf32, #tpu.memory_space<vmem>>, %arg4: memref<2x32xf32, #tpu.memory_space<vmem>>, %arg5: memref<2x32xf32, #tpu.memory_space<vmem>>, %arg6: memref<32x5xf32, #tpu.memory_space<vmem>>, %arg7: memref<1x5xf32, #tpu.memory_space<vmem>>, %arg8: memref<16x5xf32, #tpu.memory_space<vmem>>) attributes {dimension_semantics = [], scalar_prefetch = 0 : i64, scratch_operands = 0 : i64, tpu.core_type = #tpu.core_type<tc>} {
    %c0 = arith.constant 0 : index
    %c0_0 = arith.constant 0 : index
    %0 = vector.load %arg0[%c0, %c0_0] : memref<16x1xi32, #tpu.memory_space<vmem>>, vector<16x1xi32>
    %1 = tpu.iota {dimensions = array<i32: 1>} : vector<16x30xi32>
    %2 = vector.broadcast %0 : vector<16x1xi32> to vector<16x30xi32>
    %3 = arith.cmpi eq, %2, %1 : vector<16x30xi32>
    %4 = arith.extui %3 : vector<16x30xi1> to vector<16x30xi32>
    %5 = arith.sitofp %4 : vector<16x30xi32> to vector<16x30xf32>
    %c0_1 = arith.constant 0 : index
    %c0_2 = arith.constant 0 : index
    %6 = vector.load %arg1[%c0_1, %c0_2] : memref<30x128xf32, #tpu.memory_space<vmem>>, vector<30x128xf32>
    %cst = arith.constant dense<0.000000e+00> : vector<16x128xf32>
    %7 = tpu.matmul %5, %6, %cst {dimension_numbers = #tpu.dot_dimension_numbers<[1], [0], [0], [1], [0, 0, 1, 1], [], []>} : vector<16x30xf32>, vector<30x128xf32>, vector<16x128xf32> -> vector<16x128xf32>
    %c0_3 = arith.constant 0 : index
    %c0_4 = arith.constant 0 : index
    %8 = vector.load %arg2[%c0_3, %c0_4] : memref<1x128xf32, #tpu.memory_space<vmem>>, vector<1x128xf32>
    %9 = vector.broadcast %8 : vector<1x128xf32> to vector<16x128xf32>
    %10 = arith.addf %7, %9 : vector<16x128xf32>
    %11 = tpu.iota {dimensions = array<i32: 1>} : vector<2x128xi32>
    %c32_i32 = arith.constant 32 : i32
    %c0_i32 = arith.constant 0 : i32
    %12 = arith.cmpi eq, %c32_i32, %c0_i32 : i32
    %c1_i32 = arith.constant 1 : i32
    %13 = arith.select %12, %c1_i32, %c32_i32 : i32
    %14 = vector.broadcast %13 : i32 to vector<2x128xi32>
    %15 = arith.remsi %11, %14 : vector<2x128xi32>
    %c0_i32_5 = arith.constant 0 : i32
    %16 = vector.broadcast %c0_i32_5 : i32 to vector<2x128xi32>
    %17 = arith.cmpi ne, %15, %16 : vector<2x128xi32>
    %c0_i32_6 = arith.constant 0 : i32
    %18 = vector.broadcast %c0_i32_6 : i32 to vector<2x128xi32>
    %19 = arith.cmpi slt, %15, %18 : vector<2x128xi32>
    %c0_i32_7 = arith.constant 0 : i32
    %20 = arith.cmpi slt, %13, %c0_i32_7 : i32
    %21 = vector.broadcast %20 : i1 to vector<2x128xi1>
    %22 = vector.broadcast %21 : vector<2x128xi1> to vector<2x128xi1>
    %23 = arith.xori %19, %22 : vector<2x128xi1>
    %24 = arith.andi %23, %17 : vector<2x128xi1>
    %25 = vector.broadcast %13 : i32 to vector<2x128xi32>
    %26 = arith.addi %15, %25 : vector<2x128xi32>
    %27 = arith.select %24, %26, %15 : vector<2x128xi1>, vector<2x128xi32>
    %c16_i32 = arith.constant 16 : i32
    %28 = vector.broadcast %c16_i32 : i32 to vector<2x128xi32>
    %29 = arith.cmpi slt, %27, %28 : vector<2x128xi32>
    %30 = tpu.iota {dimensions = array<i32: 1>} : vector<2x32xi32>
    %c16_i32_8 = arith.constant 16 : i32
    %31 = vector.broadcast %c16_i32_8 : i32 to vector<2x32xi32>
    %32 = arith.cmpi slt, %30, %31 : vector<2x32xi32>
    %c0_9 = arith.constant 0 : index
    %c0_10 = arith.constant 0 : index
    %33 = vector.load %arg3[%c0_9, %c0_10] : memref<32x128xf32, #tpu.memory_space<vmem>>, vector<32x128xf32>
    %c0_11 = arith.constant 0 : index
    %c0_12 = arith.constant 0 : index
    %34 = vector.load %arg4[%c0_11, %c0_12] : memref<2x32xf32, #tpu.memory_space<vmem>>, vector<2x32xf32>
    %c0_13 = arith.constant 0 : index
    %c0_14 = arith.constant 0 : index
    %35 = vector.load %arg5[%c0_13, %c0_14] : memref<2x32xf32, #tpu.memory_space<vmem>>, vector<2x32xf32>
    %36 = vector.extract_strided_slice %10 {offsets = [0, 0], sizes = [2, 128], strides = [1, 1]} : vector<16x128xf32> to vector<2x128xf32>
    %37 = vector.extract_strided_slice %10 {offsets = [14, 0], sizes = [2, 128], strides = [1, 1]} : vector<16x128xf32> to vector<2x128xf32>
    %38 = arith.select %29, %36, %37 : vector<2x128xi1>, vector<2x128xf32>
    %cst_15 = arith.constant dense<0.000000e+00> : vector<2x128xf32>
    %39 = tpu.matmul %34, %33, %cst_15 {dimension_numbers = #tpu.dot_dimension_numbers<[1], [0], [0], [1], [0, 0, 1, 1], [], []>} : vector<2x32xf32>, vector<32x128xf32>, vector<2x128xf32> -> vector<2x128xf32>
    %40 = arith.addf %38, %39 : vector<2x128xf32>
    %41 = vector.extract_strided_slice %40 {offsets = [0, 0], sizes = [2, 32], strides = [1, 1]} : vector<2x128xf32> to vector<2x32xf32>
    %42 = vector.extract_strided_slice %40 {offsets = [0, 32], sizes = [2, 32], strides = [1, 1]} : vector<2x128xf32> to vector<2x32xf32>
    %43 = vector.extract_strided_slice %40 {offsets = [0, 64], sizes = [2, 32], strides = [1, 1]} : vector<2x128xf32> to vector<2x32xf32>
    %44 = vector.extract_strided_slice %40 {offsets = [0, 96], sizes = [2, 32], strides = [1, 1]} : vector<2x128xf32> to vector<2x32xf32>
    %cst_16 = arith.constant 5.000000e-01 : f32
    %45 = vector.broadcast %cst_16 : f32 to vector<2x32xf32>
    %46 = arith.mulf %45, %42 : vector<2x32xf32>
    %47 = math.tanh %46 : vector<2x32xf32>
    %cst_17 = arith.constant 5.000000e-01 : f32
    %48 = vector.broadcast %cst_17 : f32 to vector<2x32xf32>
    %49 = arith.mulf %48, %47 : vector<2x32xf32>
    %cst_18 = arith.constant 5.000000e-01 : f32
    %50 = vector.broadcast %cst_18 : f32 to vector<2x32xf32>
    %51 = arith.addf %49, %50 : vector<2x32xf32>
    %52 = arith.mulf %51, %35 : vector<2x32xf32>
    %cst_19 = arith.constant 5.000000e-01 : f32
    %53 = vector.broadcast %cst_19 : f32 to vector<2x32xf32>
    %54 = arith.mulf %53, %41 : vector<2x32xf32>
    %55 = math.tanh %54 : vector<2x32xf32>
    %cst_20 = arith.constant 5.000000e-01 : f32
    %56 = vector.broadcast %cst_20 : f32 to vector<2x32xf32>
    %57 = arith.mulf %56, %55 : vector<2x32xf32>
    %cst_21 = arith.constant 5.000000e-01 : f32
    %58 = vector.broadcast %cst_21 : f32 to vector<2x32xf32>
    %59 = arith.addf %57, %58 : vector<2x32xf32>
    %60 = math.tanh %43 : vector<2x32xf32>
    %61 = arith.mulf %59, %60 : vector<2x32xf32>
    %62 = arith.addf %52, %61 : vector<2x32xf32>
    %cst_22 = arith.constant 5.000000e-01 : f32
    %63 = vector.broadcast %cst_22 : f32 to vector<2x32xf32>
    %64 = arith.mulf %63, %44 : vector<2x32xf32>
    %65 = math.tanh %64 : vector<2x32xf32>
    %cst_23 = arith.constant 5.000000e-01 : f32
    %66 = vector.broadcast %cst_23 : f32 to vector<2x32xf32>
    %67 = arith.mulf %66, %65 : vector<2x32xf32>
    %cst_24 = arith.constant 5.000000e-01 : f32
    %68 = vector.broadcast %cst_24 : f32 to vector<2x32xf32>
    %69 = arith.addf %67, %68 : vector<2x32xf32>
    %70 = math.tanh %62 : vector<2x32xf32>
    %71 = arith.mulf %69, %70 : vector<2x32xf32>
    %72 = vector.extract_strided_slice %10 {offsets = [2, 0], sizes = [2, 128], strides = [1, 1]} : vector<16x128xf32> to vector<2x128xf32>
    %73 = vector.extract_strided_slice %10 {offsets = [12, 0], sizes = [2, 128], strides = [1, 1]} : vector<16x128xf32> to vector<2x128xf32>
    %74 = arith.select %29, %72, %73 : vector<2x128xi1>, vector<2x128xf32>
    %cst_25 = arith.constant dense<0.000000e+00> : vector<2x128xf32>
    %75 = tpu.matmul %71, %33, %cst_25 {dimension_numbers = #tpu.dot_dimension_numbers<[1], [0], [0], [1], [0, 0, 1, 1], [], []>} : vector<2x32xf32>, vector<32x128xf32>, vector<2x128xf32> -> vector<2x128xf32>
    %76 = arith.addf %74, %75 : vector<2x128xf32>
    %77 = vector.extract_strided_slice %76 {offsets = [0, 0], sizes = [2, 32], strides = [1, 1]} : vector<2x128xf32> to vector<2x32xf32>
    %78 = vector.extract_strided_slice %76 {offsets = [0, 32], sizes = [2, 32], strides = [1, 1]} : vector<2x128xf32> to vector<2x32xf32>
    %79 = vector.extract_strided_slice %76 {offsets = [0, 64], sizes = [2, 32], strides = [1, 1]} : vector<2x128xf32> to vector<2x32xf32>
    %80 = vector.extract_strided_slice %76 {offsets = [0, 96], sizes = [2, 32], strides = [1, 1]} : vector<2x128xf32> to vector<2x32xf32>
    %cst_26 = arith.constant 5.000000e-01 : f32
    %81 = vector.broadcast %cst_26 : f32 to vector<2x32xf32>
    %82 = arith.mulf %81, %78 : vector<2x32xf32>
    %83 = math.tanh %82 : vector<2x32xf32>
    %cst_27 = arith.constant 5.000000e-01 : f32
    %84 = vector.broadcast %cst_27 : f32 to vector<2x32xf32>
    %85 = arith.mulf %84, %83 : vector<2x32xf32>
    %cst_28 = arith.constant 5.000000e-01 : f32
    %86 = vector.broadcast %cst_28 : f32 to vector<2x32xf32>
    %87 = arith.addf %85, %86 : vector<2x32xf32>
    %88 = arith.mulf %87, %62 : vector<2x32xf32>
    %cst_29 = arith.constant 5.000000e-01 : f32
    %89 = vector.broadcast %cst_29 : f32 to vector<2x32xf32>
    %90 = arith.mulf %89, %77 : vector<2x32xf32>
    %91 = math.tanh %90 : vector<2x32xf32>
    %cst_30 = arith.constant 5.000000e-01 : f32
    %92 = vector.broadcast %cst_30 : f32 to vector<2x32xf32>
    %93 = arith.mulf %92, %91 : vector<2x32xf32>
    %cst_31 = arith.constant 5.000000e-01 : f32
    %94 = vector.broadcast %cst_31 : f32 to vector<2x32xf32>
    %95 = arith.addf %93, %94 : vector<2x32xf32>
    %96 = math.tanh %79 : vector<2x32xf32>
    %97 = arith.mulf %95, %96 : vector<2x32xf32>
    %98 = arith.addf %88, %97 : vector<2x32xf32>
    %cst_32 = arith.constant 5.000000e-01 : f32
    %99 = vector.broadcast %cst_32 : f32 to vector<2x32xf32>
    %100 = arith.mulf %99, %80 : vector<2x32xf32>
    %101 = math.tanh %100 : vector<2x32xf32>
    %cst_33 = arith.constant 5.000000e-01 : f32
    %102 = vector.broadcast %cst_33 : f32 to vector<2x32xf32>
    %103 = arith.mulf %102, %101 : vector<2x32xf32>
    %cst_34 = arith.constant 5.000000e-01 : f32
    %104 = vector.broadcast %cst_34 : f32 to vector<2x32xf32>
    %105 = arith.addf %103, %104 : vector<2x32xf32>
    %106 = math.tanh %98 : vector<2x32xf32>
    %107 = arith.mulf %105, %106 : vector<2x32xf32>
    %108 = vector.extract_strided_slice %10 {offsets = [4, 0], sizes = [2, 128], strides = [1, 1]} : vector<16x128xf32> to vector<2x128xf32>
    %109 = vector.extract_strided_slice %10 {offsets = [10, 0], sizes = [2, 128], strides = [1, 1]} : vector<16x128xf32> to vector<2x128xf32>
    %110 = arith.select %29, %108, %109 : vector<2x128xi1>, vector<2x128xf32>
    %cst_35 = arith.constant dense<0.000000e+00> : vector<2x128xf32>
    %111 = tpu.matmul %107, %33, %cst_35 {dimension_numbers = #tpu.dot_dimension_numbers<[1], [0], [0], [1], [0, 0, 1, 1], [], []>} : vector<2x32xf32>, vector<32x128xf32>, vector<2x128xf32> -> vector<2x128xf32>
    %112 = arith.addf %110, %111 : vector<2x128xf32>
    %113 = vector.extract_strided_slice %112 {offsets = [0, 0], sizes = [2, 32], strides = [1, 1]} : vector<2x128xf32> to vector<2x32xf32>
    %114 = vector.extract_strided_slice %112 {offsets = [0, 32], sizes = [2, 32], strides = [1, 1]} : vector<2x128xf32> to vector<2x32xf32>
    %115 = vector.extract_strided_slice %112 {offsets = [0, 64], sizes = [2, 32], strides = [1, 1]} : vector<2x128xf32> to vector<2x32xf32>
    %116 = vector.extract_strided_slice %112 {offsets = [0, 96], sizes = [2, 32], strides = [1, 1]} : vector<2x128xf32> to vector<2x32xf32>
    %cst_36 = arith.constant 5.000000e-01 : f32
    %117 = vector.broadcast %cst_36 : f32 to vector<2x32xf32>
    %118 = arith.mulf %117, %114 : vector<2x32xf32>
    %119 = math.tanh %118 : vector<2x32xf32>
    %cst_37 = arith.constant 5.000000e-01 : f32
    %120 = vector.broadcast %cst_37 : f32 to vector<2x32xf32>
    %121 = arith.mulf %120, %119 : vector<2x32xf32>
    %cst_38 = arith.constant 5.000000e-01 : f32
    %122 = vector.broadcast %cst_38 : f32 to vector<2x32xf32>
    %123 = arith.addf %121, %122 : vector<2x32xf32>
    %124 = arith.mulf %123, %98 : vector<2x32xf32>
    %cst_39 = arith.constant 5.000000e-01 : f32
    %125 = vector.broadcast %cst_39 : f32 to vector<2x32xf32>
    %126 = arith.mulf %125, %113 : vector<2x32xf32>
    %127 = math.tanh %126 : vector<2x32xf32>
    %cst_40 = arith.constant 5.000000e-01 : f32
    %128 = vector.broadcast %cst_40 : f32 to vector<2x32xf32>
    %129 = arith.mulf %128, %127 : vector<2x32xf32>
    %cst_41 = arith.constant 5.000000e-01 : f32
    %130 = vector.broadcast %cst_41 : f32 to vector<2x32xf32>
    %131 = arith.addf %129, %130 : vector<2x32xf32>
    %132 = math.tanh %115 : vector<2x32xf32>
    %133 = arith.mulf %131, %132 : vector<2x32xf32>
    %134 = arith.addf %124, %133 : vector<2x32xf32>
    %cst_42 = arith.constant 5.000000e-01 : f32
    %135 = vector.broadcast %cst_42 : f32 to vector<2x32xf32>
    %136 = arith.mulf %135, %116 : vector<2x32xf32>
    %137 = math.tanh %136 : vector<2x32xf32>
    %cst_43 = arith.constant 5.000000e-01 : f32
    %138 = vector.broadcast %cst_43 : f32 to vector<2x32xf32>
    %139 = arith.mulf %138, %137 : vector<2x32xf32>
    %cst_44 = arith.constant 5.000000e-01 : f32
    %140 = vector.broadcast %cst_44 : f32 to vector<2x32xf32>
    %141 = arith.addf %139, %140 : vector<2x32xf32>
    %142 = math.tanh %134 : vector<2x32xf32>
    %143 = arith.mulf %141, %142 : vector<2x32xf32>
    %144 = vector.extract_strided_slice %10 {offsets = [6, 0], sizes = [2, 128], strides = [1, 1]} : vector<16x128xf32> to vector<2x128xf32>
    %145 = vector.extract_strided_slice %10 {offsets = [8, 0], sizes = [2, 128], strides = [1, 1]} : vector<16x128xf32> to vector<2x128xf32>
    %146 = arith.select %29, %144, %145 : vector<2x128xi1>, vector<2x128xf32>
    %cst_45 = arith.constant dense<0.000000e+00> : vector<2x128xf32>
    %147 = tpu.matmul %143, %33, %cst_45 {dimension_numbers = #tpu.dot_dimension_numbers<[1], [0], [0], [1], [0, 0, 1, 1], [], []>} : vector<2x32xf32>, vector<32x128xf32>, vector<2x128xf32> -> vector<2x128xf32>
    %148 = arith.addf %146, %147 : vector<2x128xf32>
    %149 = vector.extract_strided_slice %148 {offsets = [0, 0], sizes = [2, 32], strides = [1, 1]} : vector<2x128xf32> to vector<2x32xf32>
    %150 = vector.extract_strided_slice %148 {offsets = [0, 32], sizes = [2, 32], strides = [1, 1]} : vector<2x128xf32> to vector<2x32xf32>
    %151 = vector.extract_strided_slice %148 {offsets = [0, 64], sizes = [2, 32], strides = [1, 1]} : vector<2x128xf32> to vector<2x32xf32>
    %152 = vector.extract_strided_slice %148 {offsets = [0, 96], sizes = [2, 32], strides = [1, 1]} : vector<2x128xf32> to vector<2x32xf32>
    %cst_46 = arith.constant 5.000000e-01 : f32
    %153 = vector.broadcast %cst_46 : f32 to vector<2x32xf32>
    %154 = arith.mulf %153, %150 : vector<2x32xf32>
    %155 = math.tanh %154 : vector<2x32xf32>
    %cst_47 = arith.constant 5.000000e-01 : f32
    %156 = vector.broadcast %cst_47 : f32 to vector<2x32xf32>
    %157 = arith.mulf %156, %155 : vector<2x32xf32>
    %cst_48 = arith.constant 5.000000e-01 : f32
    %158 = vector.broadcast %cst_48 : f32 to vector<2x32xf32>
    %159 = arith.addf %157, %158 : vector<2x32xf32>
    %160 = arith.mulf %159, %134 : vector<2x32xf32>
    %cst_49 = arith.constant 5.000000e-01 : f32
    %161 = vector.broadcast %cst_49 : f32 to vector<2x32xf32>
    %162 = arith.mulf %161, %149 : vector<2x32xf32>
    %163 = math.tanh %162 : vector<2x32xf32>
    %cst_50 = arith.constant 5.000000e-01 : f32
    %164 = vector.broadcast %cst_50 : f32 to vector<2x32xf32>
    %165 = arith.mulf %164, %163 : vector<2x32xf32>
    %cst_51 = arith.constant 5.000000e-01 : f32
    %166 = vector.broadcast %cst_51 : f32 to vector<2x32xf32>
    %167 = arith.addf %165, %166 : vector<2x32xf32>
    %168 = math.tanh %151 : vector<2x32xf32>
    %169 = arith.mulf %167, %168 : vector<2x32xf32>
    %170 = arith.addf %160, %169 : vector<2x32xf32>
    %cst_52 = arith.constant 5.000000e-01 : f32
    %171 = vector.broadcast %cst_52 : f32 to vector<2x32xf32>
    %172 = arith.mulf %171, %152 : vector<2x32xf32>
    %173 = math.tanh %172 : vector<2x32xf32>
    %cst_53 = arith.constant 5.000000e-01 : f32
    %174 = vector.broadcast %cst_53 : f32 to vector<2x32xf32>
    %175 = arith.mulf %174, %173 : vector<2x32xf32>
    %cst_54 = arith.constant 5.000000e-01 : f32
    %176 = vector.broadcast %cst_54 : f32 to vector<2x32xf32>
    %177 = arith.addf %175, %176 : vector<2x32xf32>
    %178 = math.tanh %170 : vector<2x32xf32>
    %179 = arith.mulf %177, %178 : vector<2x32xf32>
    %180 = vector.extract_strided_slice %10 {offsets = [8, 0], sizes = [2, 128], strides = [1, 1]} : vector<16x128xf32> to vector<2x128xf32>
    %181 = vector.extract_strided_slice %10 {offsets = [6, 0], sizes = [2, 128], strides = [1, 1]} : vector<16x128xf32> to vector<2x128xf32>
    %182 = arith.select %29, %180, %181 : vector<2x128xi1>, vector<2x128xf32>
    %cst_55 = arith.constant dense<0.000000e+00> : vector<2x128xf32>
    %183 = tpu.matmul %179, %33, %cst_55 {dimension_numbers = #tpu.dot_dimension_numbers<[1], [0], [0], [1], [0, 0, 1, 1], [], []>} : vector<2x32xf32>, vector<32x128xf32>, vector<2x128xf32> -> vector<2x128xf32>
    %184 = arith.addf %182, %183 : vector<2x128xf32>
    %185 = vector.extract_strided_slice %184 {offsets = [0, 0], sizes = [2, 32], strides = [1, 1]} : vector<2x128xf32> to vector<2x32xf32>
    %186 = vector.extract_strided_slice %184 {offsets = [0, 32], sizes = [2, 32], strides = [1, 1]} : vector<2x128xf32> to vector<2x32xf32>
    %187 = vector.extract_strided_slice %184 {offsets = [0, 64], sizes = [2, 32], strides = [1, 1]} : vector<2x128xf32> to vector<2x32xf32>
    %188 = vector.extract_strided_slice %184 {offsets = [0, 96], sizes = [2, 32], strides = [1, 1]} : vector<2x128xf32> to vector<2x32xf32>
    %cst_56 = arith.constant 5.000000e-01 : f32
    %189 = vector.broadcast %cst_56 : f32 to vector<2x32xf32>
    %190 = arith.mulf %189, %186 : vector<2x32xf32>
    %191 = math.tanh %190 : vector<2x32xf32>
    %cst_57 = arith.constant 5.000000e-01 : f32
    %192 = vector.broadcast %cst_57 : f32 to vector<2x32xf32>
    %193 = arith.mulf %192, %191 : vector<2x32xf32>
    %cst_58 = arith.constant 5.000000e-01 : f32
    %194 = vector.broadcast %cst_58 : f32 to vector<2x32xf32>
    %195 = arith.addf %193, %194 : vector<2x32xf32>
    %196 = arith.mulf %195, %170 : vector<2x32xf32>
    %cst_59 = arith.constant 5.000000e-01 : f32
    %197 = vector.broadcast %cst_59 : f32 to vector<2x32xf32>
    %198 = arith.mulf %197, %185 : vector<2x32xf32>
    %199 = math.tanh %198 : vector<2x32xf32>
    %cst_60 = arith.constant 5.000000e-01 : f32
    %200 = vector.broadcast %cst_60 : f32 to vector<2x32xf32>
    %201 = arith.mulf %200, %199 : vector<2x32xf32>
    %cst_61 = arith.constant 5.000000e-01 : f32
    %202 = vector.broadcast %cst_61 : f32 to vector<2x32xf32>
    %203 = arith.addf %201, %202 : vector<2x32xf32>
    %204 = math.tanh %187 : vector<2x32xf32>
    %205 = arith.mulf %203, %204 : vector<2x32xf32>
    %206 = arith.addf %196, %205 : vector<2x32xf32>
    %cst_62 = arith.constant 5.000000e-01 : f32
    %207 = vector.broadcast %cst_62 : f32 to vector<2x32xf32>
    %208 = arith.mulf %207, %188 : vector<2x32xf32>
    %209 = math.tanh %208 : vector<2x32xf32>
    %cst_63 = arith.constant 5.000000e-01 : f32
    %210 = vector.broadcast %cst_63 : f32 to vector<2x32xf32>
    %211 = arith.mulf %210, %209 : vector<2x32xf32>
    %cst_64 = arith.constant 5.000000e-01 : f32
    %212 = vector.broadcast %cst_64 : f32 to vector<2x32xf32>
    %213 = arith.addf %211, %212 : vector<2x32xf32>
    %214 = math.tanh %206 : vector<2x32xf32>
    %215 = arith.mulf %213, %214 : vector<2x32xf32>
    %216 = vector.extract_strided_slice %10 {offsets = [10, 0], sizes = [2, 128], strides = [1, 1]} : vector<16x128xf32> to vector<2x128xf32>
    %217 = vector.extract_strided_slice %10 {offsets = [4, 0], sizes = [2, 128], strides = [1, 1]} : vector<16x128xf32> to vector<2x128xf32>
    %218 = arith.select %29, %216, %217 : vector<2x128xi1>, vector<2x128xf32>
    %cst_65 = arith.constant dense<0.000000e+00> : vector<2x128xf32>
    %219 = tpu.matmul %215, %33, %cst_65 {dimension_numbers = #tpu.dot_dimension_numbers<[1], [0], [0], [1], [0, 0, 1, 1], [], []>} : vector<2x32xf32>, vector<32x128xf32>, vector<2x128xf32> -> vector<2x128xf32>
    %220 = arith.addf %218, %219 : vector<2x128xf32>
    %221 = vector.extract_strided_slice %220 {offsets = [0, 0], sizes = [2, 32], strides = [1, 1]} : vector<2x128xf32> to vector<2x32xf32>
    %222 = vector.extract_strided_slice %220 {offsets = [0, 32], sizes = [2, 32], strides = [1, 1]} : vector<2x128xf32> to vector<2x32xf32>
    %223 = vector.extract_strided_slice %220 {offsets = [0, 64], sizes = [2, 32], strides = [1, 1]} : vector<2x128xf32> to vector<2x32xf32>
    %224 = vector.extract_strided_slice %220 {offsets = [0, 96], sizes = [2, 32], strides = [1, 1]} : vector<2x128xf32> to vector<2x32xf32>
    %cst_66 = arith.constant 5.000000e-01 : f32
    %225 = vector.broadcast %cst_66 : f32 to vector<2x32xf32>
    %226 = arith.mulf %225, %222 : vector<2x32xf32>
    %227 = math.tanh %226 : vector<2x32xf32>
    %cst_67 = arith.constant 5.000000e-01 : f32
    %228 = vector.broadcast %cst_67 : f32 to vector<2x32xf32>
    %229 = arith.mulf %228, %227 : vector<2x32xf32>
    %cst_68 = arith.constant 5.000000e-01 : f32
    %230 = vector.broadcast %cst_68 : f32 to vector<2x32xf32>
    %231 = arith.addf %229, %230 : vector<2x32xf32>
    %232 = arith.mulf %231, %206 : vector<2x32xf32>
    %cst_69 = arith.constant 5.000000e-01 : f32
    %233 = vector.broadcast %cst_69 : f32 to vector<2x32xf32>
    %234 = arith.mulf %233, %221 : vector<2x32xf32>
    %235 = math.tanh %234 : vector<2x32xf32>
    %cst_70 = arith.constant 5.000000e-01 : f32
    %236 = vector.broadcast %cst_70 : f32 to vector<2x32xf32>
    %237 = arith.mulf %236, %235 : vector<2x32xf32>
    %cst_71 = arith.constant 5.000000e-01 : f32
    %238 = vector.broadcast %cst_71 : f32 to vector<2x32xf32>
    %239 = arith.addf %237, %238 : vector<2x32xf32>
    %240 = math.tanh %223 : vector<2x32xf32>
    %241 = arith.mulf %239, %240 : vector<2x32xf32>
    %242 = arith.addf %232, %241 : vector<2x32xf32>
    %cst_72 = arith.constant 5.000000e-01 : f32
    %243 = vector.broadcast %cst_72 : f32 to vector<2x32xf32>
    %244 = arith.mulf %243, %224 : vector<2x32xf32>
    %245 = math.tanh %244 : vector<2x32xf32>
    %cst_73 = arith.constant 5.000000e-01 : f32
    %246 = vector.broadcast %cst_73 : f32 to vector<2x32xf32>
    %247 = arith.mulf %246, %245 : vector<2x32xf32>
    %cst_74 = arith.constant 5.000000e-01 : f32
    %248 = vector.broadcast %cst_74 : f32 to vector<2x32xf32>
    %249 = arith.addf %247, %248 : vector<2x32xf32>
    %250 = math.tanh %242 : vector<2x32xf32>
    %251 = arith.mulf %249, %250 : vector<2x32xf32>
    %252 = vector.extract_strided_slice %10 {offsets = [12, 0], sizes = [2, 128], strides = [1, 1]} : vector<16x128xf32> to vector<2x128xf32>
    %253 = vector.extract_strided_slice %10 {offsets = [2, 0], sizes = [2, 128], strides = [1, 1]} : vector<16x128xf32> to vector<2x128xf32>
    %254 = arith.select %29, %252, %253 : vector<2x128xi1>, vector<2x128xf32>
    %cst_75 = arith.constant dense<0.000000e+00> : vector<2x128xf32>
    %255 = tpu.matmul %251, %33, %cst_75 {dimension_numbers = #tpu.dot_dimension_numbers<[1], [0], [0], [1], [0, 0, 1, 1], [], []>} : vector<2x32xf32>, vector<32x128xf32>, vector<2x128xf32> -> vector<2x128xf32>
    %256 = arith.addf %254, %255 : vector<2x128xf32>
    %257 = vector.extract_strided_slice %256 {offsets = [0, 0], sizes = [2, 32], strides = [1, 1]} : vector<2x128xf32> to vector<2x32xf32>
    %258 = vector.extract_strided_slice %256 {offsets = [0, 32], sizes = [2, 32], strides = [1, 1]} : vector<2x128xf32> to vector<2x32xf32>
    %259 = vector.extract_strided_slice %256 {offsets = [0, 64], sizes = [2, 32], strides = [1, 1]} : vector<2x128xf32> to vector<2x32xf32>
    %260 = vector.extract_strided_slice %256 {offsets = [0, 96], sizes = [2, 32], strides = [1, 1]} : vector<2x128xf32> to vector<2x32xf32>
    %cst_76 = arith.constant 5.000000e-01 : f32
    %261 = vector.broadcast %cst_76 : f32 to vector<2x32xf32>
    %262 = arith.mulf %261, %258 : vector<2x32xf32>
    %263 = math.tanh %262 : vector<2x32xf32>
    %cst_77 = arith.constant 5.000000e-01 : f32
    %264 = vector.broadcast %cst_77 : f32 to vector<2x32xf32>
    %265 = arith.mulf %264, %263 : vector<2x32xf32>
    %cst_78 = arith.constant 5.000000e-01 : f32
    %266 = vector.broadcast %cst_78 : f32 to vector<2x32xf32>
    %267 = arith.addf %265, %266 : vector<2x32xf32>
    %268 = arith.mulf %267, %242 : vector<2x32xf32>
    %cst_79 = arith.constant 5.000000e-01 : f32
    %269 = vector.broadcast %cst_79 : f32 to vector<2x32xf32>
    %270 = arith.mulf %269, %257 : vector<2x32xf32>
    %271 = math.tanh %270 : vector<2x32xf32>
    %cst_80 = arith.constant 5.000000e-01 : f32
    %272 = vector.broadcast %cst_80 : f32 to vector<2x32xf32>
    %273 = arith.mulf %272, %271 : vector<2x32xf32>
    %cst_81 = arith.constant 5.000000e-01 : f32
    %274 = vector.broadcast %cst_81 : f32 to vector<2x32xf32>
    %275 = arith.addf %273, %274 : vector<2x32xf32>
    %276 = math.tanh %259 : vector<2x32xf32>
    %277 = arith.mulf %275, %276 : vector<2x32xf32>
    %278 = arith.addf %268, %277 : vector<2x32xf32>
    %cst_82 = arith.constant 5.000000e-01 : f32
    %279 = vector.broadcast %cst_82 : f32 to vector<2x32xf32>
    %280 = arith.mulf %279, %260 : vector<2x32xf32>
    %281 = math.tanh %280 : vector<2x32xf32>
    %cst_83 = arith.constant 5.000000e-01 : f32
    %282 = vector.broadcast %cst_83 : f32 to vector<2x32xf32>
    %283 = arith.mulf %282, %281 : vector<2x32xf32>
    %cst_84 = arith.constant 5.000000e-01 : f32
    %284 = vector.broadcast %cst_84 : f32 to vector<2x32xf32>
    %285 = arith.addf %283, %284 : vector<2x32xf32>
    %286 = math.tanh %278 : vector<2x32xf32>
    %287 = arith.mulf %285, %286 : vector<2x32xf32>
    %288 = vector.extract_strided_slice %10 {offsets = [14, 0], sizes = [2, 128], strides = [1, 1]} : vector<16x128xf32> to vector<2x128xf32>
    %289 = vector.extract_strided_slice %10 {offsets = [0, 0], sizes = [2, 128], strides = [1, 1]} : vector<16x128xf32> to vector<2x128xf32>
    %290 = arith.select %29, %288, %289 : vector<2x128xi1>, vector<2x128xf32>
    %cst_85 = arith.constant dense<0.000000e+00> : vector<2x128xf32>
    %291 = tpu.matmul %287, %33, %cst_85 {dimension_numbers = #tpu.dot_dimension_numbers<[1], [0], [0], [1], [0, 0, 1, 1], [], []>} : vector<2x32xf32>, vector<32x128xf32>, vector<2x128xf32> -> vector<2x128xf32>
    %292 = arith.addf %290, %291 : vector<2x128xf32>
    %293 = vector.extract_strided_slice %292 {offsets = [0, 0], sizes = [2, 32], strides = [1, 1]} : vector<2x128xf32> to vector<2x32xf32>
    %294 = vector.extract_strided_slice %292 {offsets = [0, 32], sizes = [2, 32], strides = [1, 1]} : vector<2x128xf32> to vector<2x32xf32>
    %295 = vector.extract_strided_slice %292 {offsets = [0, 64], sizes = [2, 32], strides = [1, 1]} : vector<2x128xf32> to vector<2x32xf32>
    %296 = vector.extract_strided_slice %292 {offsets = [0, 96], sizes = [2, 32], strides = [1, 1]} : vector<2x128xf32> to vector<2x32xf32>
    %cst_86 = arith.constant 5.000000e-01 : f32
    %297 = vector.broadcast %cst_86 : f32 to vector<2x32xf32>
    %298 = arith.mulf %297, %294 : vector<2x32xf32>
    %299 = math.tanh %298 : vector<2x32xf32>
    %cst_87 = arith.constant 5.000000e-01 : f32
    %300 = vector.broadcast %cst_87 : f32 to vector<2x32xf32>
    %301 = arith.mulf %300, %299 : vector<2x32xf32>
    %cst_88 = arith.constant 5.000000e-01 : f32
    %302 = vector.broadcast %cst_88 : f32 to vector<2x32xf32>
    %303 = arith.addf %301, %302 : vector<2x32xf32>
    %304 = arith.mulf %303, %278 : vector<2x32xf32>
    %cst_89 = arith.constant 5.000000e-01 : f32
    %305 = vector.broadcast %cst_89 : f32 to vector<2x32xf32>
    %306 = arith.mulf %305, %293 : vector<2x32xf32>
    %307 = math.tanh %306 : vector<2x32xf32>
    %cst_90 = arith.constant 5.000000e-01 : f32
    %308 = vector.broadcast %cst_90 : f32 to vector<2x32xf32>
    %309 = arith.mulf %308, %307 : vector<2x32xf32>
    %cst_91 = arith.constant 5.000000e-01 : f32
    %310 = vector.broadcast %cst_91 : f32 to vector<2x32xf32>
    %311 = arith.addf %309, %310 : vector<2x32xf32>
    %312 = math.tanh %295 : vector<2x32xf32>
    %313 = arith.mulf %311, %312 : vector<2x32xf32>
    %314 = arith.addf %304, %313 : vector<2x32xf32>
    %cst_92 = arith.constant 5.000000e-01 : f32
    %315 = vector.broadcast %cst_92 : f32 to vector<2x32xf32>
    %316 = arith.mulf %315, %296 : vector<2x32xf32>
    %317 = math.tanh %316 : vector<2x32xf32>
    %cst_93 = arith.constant 5.000000e-01 : f32
    %318 = vector.broadcast %cst_93 : f32 to vector<2x32xf32>
    %319 = arith.mulf %318, %317 : vector<2x32xf32>
    %cst_94 = arith.constant 5.000000e-01 : f32
    %320 = vector.broadcast %cst_94 : f32 to vector<2x32xf32>
    %321 = arith.addf %319, %320 : vector<2x32xf32>
    %322 = math.tanh %314 : vector<2x32xf32>
    %323 = arith.mulf %321, %322 : vector<2x32xf32>
    %324 = arith.select %32, %71, %323 : vector<2x32xi1>, vector<2x32xf32>
    %325 = arith.select %32, %107, %287 : vector<2x32xi1>, vector<2x32xf32>
    %326 = arith.select %32, %143, %251 : vector<2x32xi1>, vector<2x32xf32>
    %327 = arith.select %32, %179, %215 : vector<2x32xi1>, vector<2x32xf32>
    %328 = arith.select %32, %215, %179 : vector<2x32xi1>, vector<2x32xf32>
    %329 = arith.select %32, %251, %143 : vector<2x32xi1>, vector<2x32xf32>
    %330 = arith.select %32, %287, %107 : vector<2x32xi1>, vector<2x32xf32>
    %331 = arith.select %32, %323, %71 : vector<2x32xi1>, vector<2x32xf32>
    %332 = tpu.concatenate %324, %325, %326, %327, %328, %329, %330, %331 in 0 : vector<2x32xf32>, vector<2x32xf32>, vector<2x32xf32>, vector<2x32xf32>, vector<2x32xf32>, vector<2x32xf32>, vector<2x32xf32>, vector<2x32xf32> -> vector<16x32xf32>
    %c0_95 = arith.constant 0 : index
    %c0_96 = arith.constant 0 : index
    %333 = vector.load %arg6[%c0_95, %c0_96] : memref<32x5xf32, #tpu.memory_space<vmem>>, vector<32x5xf32>
    %cst_97 = arith.constant dense<0.000000e+00> : vector<16x5xf32>
    %334 = tpu.matmul %332, %333, %cst_97 {dimension_numbers = #tpu.dot_dimension_numbers<[1], [0], [0], [1], [0, 0, 1, 1], [], []>} : vector<16x32xf32>, vector<32x5xf32>, vector<16x5xf32> -> vector<16x5xf32>
    %c0_98 = arith.constant 0 : index
    %c0_99 = arith.constant 0 : index
    %335 = vector.load %arg7[%c0_98, %c0_99] : memref<1x5xf32, #tpu.memory_space<vmem>>, vector<1x5xf32>
    %336 = vector.broadcast %335 : vector<1x5xf32> to vector<16x5xf32>
    %337 = arith.addf %334, %336 : vector<16x5xf32>
    %c0_100 = arith.constant 0 : index
    %c0_101 = arith.constant 0 : index
    %338 = vector.load %arg8[%c0_100, %c0_101] : memref<16x5xf32, #tpu.memory_space<vmem>>, vector<16x5xf32>
    tpu.vector_store %arg8[%c0_100, %c0_101], %337 {strides = array<i32>} : memref<16x5xf32, #tpu.memory_space<vmem>>, vector<16x5xf32>,
    return
  }
}

</mosaic_0001>

<llo_original>
// kernel: tpu_custom_call.1
$region0: #{tpu_custom_call.1}
  #allocation0 [shape = 'u32[]', space=smem, size = 0x4, offset = 0x4, fixed_abs, tag = 'smem constant byte address 0x4 - core index']
  #allocation1 [shape = 'u32[144,128]{1,0:T(1,128)}', space=vmem, size = 0x12000, scoped, tag = 'internal scratch']
  %s0 = inlined_call_operand.vmem [shape: s32[16,1], index: 0, kind: input, shape index: {}]
  %s1 = inlined_call_operand.vmem [shape: f32[30,128], index: 1, kind: input, shape index: {}]
  %s2 = inlined_call_operand.vmem [shape: f32[1,128], index: 2, kind: input, shape index: {}]
  %s3 = inlined_call_operand.hbm [shape: f32[32,128], index: 3, kind: input, shape index: {}]
  %s4 = inlined_call_operand.vmem [shape: f32[2,32], index: 4, kind: input, shape index: {}]
  %s5 = inlined_call_operand.vmem [shape: f32[2,32], index: 5, kind: input, shape index: {}]
  %s6 = inlined_call_operand.vmem [shape: f32[32,5], index: 6, kind: input, shape index: {}]
  %s7 = inlined_call_operand.vmem [shape: f32[1,5], index: 7, kind: input, shape index: {}]
  %s8 = inlined_call_operand.vmem [shape: f32[16,5], index: 8, kind: output, shape index: {}]
  %s9 = sld [smem:[#allocation0]]
  $region46: #{tpu_custom_call.1} parent=0
    _
  %s11 = ssub.s32 1, %s9
  %s12 = scalar_select 0, %s11, %s9
  $region1: #{tpu_custom_call.1} parent=0
    #allocation2 [shape = 'u8[16384]{0}', space=vmem, size = 0x4000, scoped, tag = 'input window, operand 3, single buffered']
    #allocation3 [shape = 's32[1]{0}', space=sflag, size = 0x4, scoped, tag = 'scoped memory for tpu_custom_call.1']
    %13 = vsyncpa [#allocation3], 0
    // Predicated region
    $region2: #{tpu_custom_call.1} parent=1 // pred_check
      _
    $region3: #{tpu_custom_call.1} parent=1 // pred_check_branch
      %15 = sbr.rel (0) target = $region5
    $region4: #{tpu_custom_call.1} parent=1 // pred_region
      _
    $region5: #{tpu_custom_call.1} parent=1 // pred_fallthru
      _
    // Predicated region
    $region6: #{tpu_custom_call.1} parent=1 // pred_check
      _
    $region7: #{tpu_custom_call.1} parent=1 // pred_check_branch
      %17 = sbr.rel (0) target = $region9
    $region8: #{tpu_custom_call.1} parent=1 // pred_region
      _
    $region9: #{tpu_custom_call.1} parent=1 // pred_fallthru
      _
    // Predicated region
    $region10: #{tpu_custom_call.1} parent=1 // pred_check
      _
    $region11: #{tpu_custom_call.1} parent=1 // pred_check_branch
      %19 = sbr.rel (0) target = $region13
    $region12: #{tpu_custom_call.1} parent=1 // pred_region
      _
    $region13: #{tpu_custom_call.1} parent=1 // pred_fallthru
      _
    // Predicated region
    $region14: #{tpu_custom_call.1} parent=1 // pred_check
      _
    $region15: #{tpu_custom_call.1} parent=1 // pred_check_branch
      %21 = sbr.rel (0) target = $region17
    $region16: #{tpu_custom_call.1} parent=1 // pred_region
      %s23 = ssub.s32 512, 512
      %24 = vsyncadd [#allocation3], %s23
      %s25 = sshll.u32 [#allocation2], 4
      %s26 = int_to_ptr.vmem [resolvable:$true] %s25
      %31 = dma.hbm_to_vmem [thread:$0]  %s3, 512, %s26, [#allocation3], 128, 128, 8
    $region17: #{tpu_custom_call.1} parent=1 // pred_fallthru
      _
    // Predicated region
    $region18: #{tpu_custom_call.1} parent=1 // pred_check
      _
    $region19: #{tpu_custom_call.1} parent=1 // pred_check_branch
      %33 = sbr.rel (0) target = $region21
    $region20: #{tpu_custom_call.1} parent=1 // pred_region
      _
    $region21: #{tpu_custom_call.1} parent=1 // pred_fallthru
      _
    // Predicated region
    $region22: #{tpu_custom_call.1} parent=1 // pred_check
      _
    $region23: #{tpu_custom_call.1} parent=1 // pred_check_branch
      %35 = sbr.rel (0) target = $region25
    $region24: #{tpu_custom_call.1} parent=1 // pred_region
      _
    $region25: #{tpu_custom_call.1} parent=1 // pred_fallthru
      _
    // Predicated region
    $region26: #{tpu_custom_call.1} parent=1 // pred_check
      _
    $region27: #{tpu_custom_call.1} parent=1 // pred_check_branch
      %37 = sbr.rel (0) target = $region29
    $region28: #{tpu_custom_call.1} parent=1 // pred_region
      _
    $region29: #{tpu_custom_call.1} parent=1 // pred_fallthru
      _
    // Predicated region
    $region30: #{tpu_custom_call.1} parent=1 // pred_check
      _
    $region31: #{tpu_custom_call.1} parent=1 // pred_check_branch
      %39 = sbr.rel (0) target = $region33
    $region32: #{tpu_custom_call.1} parent=1 // pred_region
      _
    $region33: #{tpu_custom_call.1} parent=1 // pred_fallthru
      _
    // Predicated region
    $region34: #{tpu_custom_call.1} parent=1 // pred_check
      _
    $region35: #{tpu_custom_call.1} parent=1 // pred_check_branch
      %41 = sbr.rel (0) target = $region37
    $region36: #{tpu_custom_call.1} parent=1 // pred_region
      %42 = dma.done [#allocation3], 512
    $region37: #{tpu_custom_call.1} parent=1 // pred_fallthru
      _
    %v43 = vld [vmem:[%s0] sm:$0xff]
    %v44 = vld [vmem:[%s0 + $0x8] sm:$0xff]
    %v45 = vlaneseq
    %v46 = vand.u32 %v45, 127
    %47 = vset.pattern.permute.xlu0 0
    %48 = vperm.xlu0 %47, %v43
    %v49 = vpop.permute.xlu0 %48
    %50 = vset.pattern.permute.xlu0 0
    %51 = vperm.xlu0 %50, %v44
    %v52 = vpop.permute.xlu0 %51
    %vm53 = vcmp.eq.s32.totalorder %v49, %v46
    %vm54 = vcmp.eq.s32.totalorder %v52, %v46
    %v55 = vsel %vm53, 1, 0
    %v56 = vsel %vm54, 1, 0
    %v57 = vcvt.s32.f32 %v55
    %v58 = vcvt.s32.f32 %v56
    %v59 = vld [vmem:[%s1] sm:$0xff]
    %v60 = vld [vmem:[%s1 + $0x8] sm:$0xff]
    %v61 = vld [vmem:[%s1 + $0x10] sm:$0xff]
    %v62 = vld [vmem:[%s1 + $0x18] sm:$0x3f]
    %v63 = vld [vmem:[%s2] sm:$0x1]
    %v65 = vlaneseq
    %v66 = vshrl.u32 %v65, 7
    %v67 = vsub.s32 0, %v66
    %v68 = vrot.slane %v63, %v67
    %vm70 = vcmask 244736
    %v72 = vsel %vm70, %v57, 0
    %v75 = vsel %vm70, %v58, 0
    %vm77 = vcmask 1045504
    %v79 = vsel %vm77, %v62, 0
    %81 = vmatprep.subr.mxu0 0.0
    %82 = vmatpush1.msra.mxu0 0.0
    %83 = vmatprep.subr.mxu0 0.0
    %84 = vmatpush1.msra.mxu0 0.0
    %85 = vmatprep.subr.mxu0 0.0
    %86 = vmatpush1.msra.mxu0 0.0
    %87 = vmatprep.subr.mxu0 0.0
    %88 = vmatpush1.msra.mxu0 0.0
    %89 = vmatprep.subr.mxu0 0.0
    %90 = vmatpush1.msra.mxu0 0.0
    %91 = vmatprep.subr.mxu0 0.0
    %92 = vmatpush1.msra.mxu0 0.0
    %93 = vmatprep.subr.mxu0 0.0
    %94 = vmatpush1.msra.mxu0 0.0
    %95 = vmatprep.subr.mxu0 0.0
    %96 = vmatpush1.msra.mxu0 0.0
    %97 = vmatprep.subr.mxu0 0.0
    %98 = vmatpush1.msra.mxu0 0.0
    %99 = vmatprep.subr.mxu0 0.0
    %100 = vmatpush1.msra.mxu0 0.0
    %101 = vmatprep.subr.mxu0 0.0
    %102 = vmatpush1.msra.mxu0 0.0
    %103 = vmatprep.subr.mxu0 0.0
    %104 = vmatpush1.msra.mxu0 0.0
    %105 = vmatprep.subr.mxu0 0.0
    %106 = vmatpush1.msra.mxu0 %v79
    %107 = vmatprep.subr.mxu0 0.0
    %108 = vmatpush1.msra.mxu0 %v61
    %109 = vmatprep.subr.mxu0 0.0
    %110 = vmatpush1.msra.mxu0 %v60
    %111 = vmatprep.subr.mxu0 0.0
    %112 = vmatpush1.msra.mxu0 %v59
    %113 = vmatprep.subr.mxu0 0.0
    %114 = vmatpush2.msra.mxu0 0.0
    %115 = vmatprep.subr.mxu0 0.0
    %116 = vmatpush2.msra.mxu0 0.0
    %117 = vmatprep.subr.mxu0 0.0
    %118 = vmatpush2.msra.mxu0 0.0
    %119 = vmatprep.subr.mxu0 0.0
    %120 = vmatpush2.msra.mxu0 0.0
    %121 = vmatprep.subr.mxu0 0.0
    %122 = vmatpush2.msra.mxu0 0.0
    %123 = vmatprep.subr.mxu0 0.0
    %124 = vmatpush2.msra.mxu0 0.0
    %125 = vmatprep.subr.mxu0 0.0
    %126 = vmatpush2.msra.mxu0 0.0
    %127 = vmatprep.subr.mxu0 0.0
    %128 = vmatpush2.msra.mxu0 0.0
    %129 = vmatprep.subr.mxu0 0.0
    %130 = vmatpush2.msra.mxu0 0.0
    %131 = vmatprep.subr.mxu0 0.0
    %132 = vmatpush2.msra.mxu0 0.0
    %133 = vmatprep.subr.mxu0 0.0
    %134 = vmatpush2.msra.mxu0 0.0
    %135 = vmatprep.subr.mxu0 0.0
    %136 = vmatpush2.msra.mxu0 0.0
    %137 = vmatprep.subr.mxu0 0.0
    %138 = vmatpush2.msra.mxu0 0.0
    %139 = vmatprep.subr.mxu0 0.0
    %140 = vmatpush2.msra.mxu0 0.0
    %141 = vmatprep.subr.mxu0 0.0
    %142 = vmatpush2.msra.mxu0 0.0
    %143 = vmatprep.subr.mxu0 0.0
    %144 = vmatpush2.msra.mxu0 0.0
    %145 = vmatprep.mubr.f32.mxu0 0.0
    %146 = vmatmul.mubr.f32.gmra.mxu0 %v72
    %v147 = vpop.f32.mrf.mxu0
    %v148 = vadd.f32 %v68, %v147
    %v149 = vpop.f32.mrf.mxu0
    %150 = vmatprep.mubr.f32.mxu0 0.0
    %151 = vmatmul.mubr.f32.gmra.mxu0 %v75
    %v152 = vpop.f32.mrf.mxu0
    %v153 = vadd.f32 %v68, %v152
    %v154 = vpop.f32.mrf.mxu0
    %155 = vdwg.mxu0
    %vm156 = vcmp.lt.s32.totalorder %v46, 0
    %v157 = vsub.s32 0, %v46
    %v158 = vsel %vm156, %v157, %v46
    %v159 = vshrl.u32 %v158, 5
    %v160 = vand.u32 %v158, 31
    %v161 = vsub.s32 0, %v160
    %v162 = vsel %vm156, %v161, %v160
    %vm163 = vcmp.ne.s32.totalorder %v162, 0
    %vm164 = vcmp.lt.s32.totalorder %v162, 0
    %vm165 = vmand %vm164, %vm163
    %v166 = vadd.s32 %v162, 32
    %v167 = vsel %vm165, %v166, %v162
    %vm168 = vcmp.lt.s32.totalorder %v167, 16
    %vm169 = vcmp.lt.s32.totalorder %v46, 16
    %v170 = vld [vmem:[#allocation2] sm:$0xff]
    %v171 = vld [vmem:[#allocation2 + $0x8] sm:$0xff]
    %v172 = vld [vmem:[#allocation2 + $0x10] sm:$0xff]
    %v173 = vld [vmem:[#allocation2 + $0x18] sm:$0xff]
    %v174 = vld [vmem:[%s4] sm:$0x3]
    %v175 = vld [vmem:[%s5] sm:$0x3]
    %v177 = vrot.slane %v153, 6
    %v179 = vsel %vm168, %v148, %v177
    %vm180 = vcmask 261120
    %v182 = vsel %vm180, %v174, 0
    %184 = vmatprep.subr.mxu0 0.0
    %185 = vmatpush1.msra.mxu0 0.0
    %186 = vmatprep.subr.mxu0 0.0
    %187 = vmatpush1.msra.mxu0 0.0
    %188 = vmatprep.subr.mxu0 0.0
    %189 = vmatpush1.msra.mxu0 0.0
    %190 = vmatprep.subr.mxu0 0.0
    %191 = vmatpush1.msra.mxu0 0.0
    %192 = vmatprep.subr.mxu0 0.0
    %193 = vmatpush1.msra.mxu0 0.0
    %194 = vmatprep.subr.mxu0 0.0
    %195 = vmatpush1.msra.mxu0 0.0
    %196 = vmatprep.subr.mxu0 0.0
    %197 = vmatpush1.msra.mxu0 0.0
    %198 = vmatprep.subr.mxu0 0.0
    %199 = vmatpush1.msra.mxu0 0.0
    %200 = vmatprep.subr.mxu0 0.0
    %201 = vmatpush1.msra.mxu0 0.0
    %202 = vmatprep.subr.mxu0 0.0
    %203 = vmatpush1.msra.mxu0 0.0
    %204 = vmatprep.subr.mxu0 0.0
    %205 = vmatpush1.msra.mxu0 0.0
    %206 = vmatprep.subr.mxu0 0.0
    %207 = vmatpush1.msra.mxu0 0.0
    %208 = vmatprep.subr.mxu0 0.0
    %209 = vmatpush1.msra.mxu0 %v173
    %210 = vmatprep.subr.mxu0 0.0
    %211 = vmatpush1.msra.mxu0 %v172
    %212 = vmatprep.subr.mxu0 0.0
    %213 = vmatpush1.msra.mxu0 %v171
    %214 = vmatprep.subr.mxu0 0.0
    %215 = vmatpush1.msra.mxu0 %v170
    %216 = vmatprep.subr.mxu0 0.0
    %217 = vmatpush2.msra.mxu0 0.0
    %218 = vmatprep.subr.mxu0 0.0
    %219 = vmatpush2.msra.mxu0 0.0
    %220 = vmatprep.subr.mxu0 0.0
    %221 = vmatpush2.msra.mxu0 0.0
    %222 = vmatprep.subr.mxu0 0.0
    %223 = vmatpush2.msra.mxu0 0.0
    %224 = vmatprep.subr.mxu0 0.0
    %225 = vmatpush2.msra.mxu0 0.0
    %226 = vmatprep.subr.mxu0 0.0
    %227 = vmatpush2.msra.mxu0 0.0
    %228 = vmatprep.subr.mxu0 0.0
    %229 = vmatpush2.msra.mxu0 0.0
    %230 = vmatprep.subr.mxu0 0.0
    %231 = vmatpush2.msra.mxu0 0.0
    %232 = vmatprep.subr.mxu0 0.0
    %233 = vmatpush2.msra.mxu0 0.0
    %234 = vmatprep.subr.mxu0 0.0
    %235 = vmatpush2.msra.mxu0 0.0
    %236 = vmatprep.subr.mxu0 0.0
    %237 = vmatpush2.msra.mxu0 0.0
    %238 = vmatprep.subr.mxu0 0.0
    %239 = vmatpush2.msra.mxu0 0.0
    %240 = vmatprep.subr.mxu0 0.0
    %241 = vmatpush2.msra.mxu0 0.0
    %242 = vmatprep.subr.mxu0 0.0
    %243 = vmatpush2.msra.mxu0 0.0
    %244 = vmatprep.subr.mxu0 0.0
    %245 = vmatpush2.msra.mxu0 0.0
    %246 = vmatprep.subr.mxu0 0.0
    %247 = vmatpush2.msra.mxu0 0.0
    %248 = vmatprep.mubr.f32.mxu0 0.0
    %249 = vmatmul.mubr.f32.gmra.mxu0 %v182
    %v250 = vpop.f32.mrf.mxu0
    %v251 = vadd.f32 0.0, %v250
    %v252 = vpop.f32.mrf.mxu0
    %253 = vdwg.mxu0
    %v254 = vadd.f32 %v179, %v251
    %v255 = vmul.f32 %v254, 0.5
    %v256 = vtanh.pop %v255
    %v257 = vmul.f32 %v256, 0.5
    %v258 = vadd.f32 %v257, 0.5
    %260 = vrot.lane.b32.xlu0 %v175, 32
    %v261 = vpop.permute.xlu0 %260
    %v263 = vmul.f32 %v258, %v261
    %v264 = vtanh.pop %v254
    %266 = vrot.lane.b32.xlu0 %v264, 64
    %v267 = vpop.permute.xlu0 %266
    %v269 = vmul.f32 %v258, %v267
    %271 = vrot.lane.b32.xlu0 %v269, 32
    %v272 = vpop.permute.xlu0 %271
    %v274 = vadd.f32 %v263, %v272
    %v275 = vtanh.pop %v274
    %277 = vrot.lane.b32.xlu0 %v275, 64
    %v278 = vpop.permute.xlu0 %277
    %v280 = vmul.f32 %v258, %v278
    %v281 = vrot.slane %v153, 2
    %v283 = vsel %vm168, %v148, %v281
    %285 = vrot.lane.b32.xlu0 %v280, 32
    %v286 = vpop.permute.xlu0 %285
    %v287 = vsel %vm180, %v286, 0
    %289 = vmatprep.subr.mxu0 0.0
    %290 = vmatpush1.msra.mxu0 0.0
    %291 = vmatprep.subr.mxu0 0.0
    %292 = vmatpush1.msra.mxu0 0.0
    %293 = vmatprep.subr.mxu0 0.0
    %294 = vmatpush1.msra.mxu0 0.0
    %295 = vmatprep.subr.mxu0 0.0
    %296 = vmatpush1.msra.mxu0 0.0
    %297 = vmatprep.subr.mxu0 0.0
    %298 = vmatpush1.msra.mxu0 0.0
    %299 = vmatprep.subr.mxu0 0.0
    %300 = vmatpush1.msra.mxu0 0.0
    %301 = vmatprep.subr.mxu0 0.0
    %302 = vmatpush1.msra.mxu0 0.0
    %303 = vmatprep.subr.mxu0 0.0
    %304 = vmatpush1.msra.mxu0 0.0
    %305 = vmatprep.subr.mxu0 0.0
    %306 = vmatpush1.msra.mxu0 0.0
    %307 = vmatprep.subr.mxu0 0.0
    %308 = vmatpush1.msra.mxu0 0.0
    %309 = vmatprep.subr.mxu0 0.0
    %310 = vmatpush1.msra.mxu0 0.0
    %311 = vmatprep.subr.mxu0 0.0
    %312 = vmatpush1.msra.mxu0 0.0
    %313 = vmatprep.subr.mxu0 0.0
    %314 = vmatpush1.msra.mxu0 %v173
    %315 = vmatprep.subr.mxu0 0.0
    %316 = vmatpush1.msra.mxu0 %v172
    %317 = vmatprep.subr.mxu0 0.0
    %318 = vmatpush1.msra.mxu0 %v171
    %319 = vmatprep.subr.mxu0 0.0
    %320 = vmatpush1.msra.mxu0 %v170
    %321 = vmatprep.subr.mxu0 0.0
    %322 = vmatpush2.msra.mxu0 0.0
    %323 = vmatprep.subr.mxu0 0.0
    %324 = vmatpush2.msra.mxu0 0.0
    %325 = vmatprep.subr.mxu0 0.0
    %326 = vmatpush2.msra.mxu0 0.0
    %327 = vmatprep.subr.mxu0 0.0
    %328 = vmatpush2.msra.mxu0 0.0
    %329 = vmatprep.subr.mxu0 0.0
    %330 = vmatpush2.msra.mxu0 0.0
    %331 = vmatprep.subr.mxu0 0.0
    %332 = vmatpush2.msra.mxu0 0.0
    %333 = vmatprep.subr.mxu0 0.0
    %334 = vmatpush2.msra.mxu0 0.0
    %335 = vmatprep.subr.mxu0 0.0
    %336 = vmatpush2.msra.mxu0 0.0
    %337 = vmatprep.subr.mxu0 0.0
    %338 = vmatpush2.msra.mxu0 0.0
    %339 = vmatprep.subr.mxu0 0.0
    %340 = vmatpush2.msra.mxu0 0.0
    %341 = vmatprep.subr.mxu0 0.0
    %342 = vmatpush2.msra.mxu0 0.0
    %343 = vmatprep.subr.mxu0 0.0
    %344 = vmatpush2.msra.mxu0 0.0
    %345 = vmatprep.subr.mxu0 0.0
    %346 = vmatpush2.msra.mxu0 0.0
    %347 = vmatprep.subr.mxu0 0.0
    %348 = vmatpush2.msra.mxu0 0.0
    %349 = vmatprep.subr.mxu0 0.0
    %350 = vmatpush2.msra.mxu0 0.0
    %351 = vmatprep.subr.mxu0 0.0
    %352 = vmatpush2.msra.mxu0 0.0
    %353 = vmatprep.mubr.f32.mxu0 0.0
    %354 = vmatmul.mubr.f32.gmra.mxu0 %v287
    %v355 = vpop.f32.mrf.mxu0
    %v356 = vadd.f32 0.0, %v355
    %v357 = vpop.f32.mrf.mxu0
    %358 = vdwg.mxu0
    %v360 = vrot.slane %v356, 6
    %v362 = vadd.f32 %v283, %v360
    %v363 = vmul.f32 %v362, 0.5
    %v364 = vtanh.pop %v363
    %v365 = vmul.f32 %v364, 0.5
    %v366 = vadd.f32 %v365, 0.5
    %v368 = vrot.slane %v274, 6
    %v370 = vmul.f32 %v366, %v368
    %v371 = vtanh.pop %v362
    %373 = vrot.lane.b32.xlu0 %v371, 64
    %v374 = vpop.permute.xlu0 %373
    %v376 = vmul.f32 %v366, %v374
    %378 = vrot.lane.b32.xlu0 %v376, 32
    %v379 = vpop.permute.xlu0 %378
    %v381 = vadd.f32 %v370, %v379
    %v382 = vtanh.pop %v381
    %384 = vrot.lane.b32.xlu0 %v382, 64
    %v385 = vpop.permute.xlu0 %384
    %v387 = vmul.f32 %v366, %v385
    %v389 = vrot.slane %v387, 2
    %390 = vrot.lane.b32.xlu0 %v389, 32
    %v391 = vpop.permute.xlu0 %390
    %v392 = vsel %vm180, %v391, 0
    %394 = vmatprep.subr.mxu0 0.0
    %395 = vmatpush1.msra.mxu0 0.0
    %396 = vmatprep.subr.mxu0 0.0
    %397 = vmatpush1.msra.mxu0 0.0
    %398 = vmatprep.subr.mxu0 0.0
    %399 = vmatpush1.msra.mxu0 0.0
    %400 = vmatprep.subr.mxu0 0.0
    %401 = vmatpush1.msra.mxu0 0.0
    %402 = vmatprep.subr.mxu0 0.0
    %403 = vmatpush1.msra.mxu0 0.0
    %404 = vmatprep.subr.mxu0 0.0
    %405 = vmatpush1.msra.mxu0 0.0
    %406 = vmatprep.subr.mxu0 0.0
    %407 = vmatpush1.msra.mxu0 0.0
    %408 = vmatprep.subr.mxu0 0.0
    %409 = vmatpush1.msra.mxu0 0.0
    %410 = vmatprep.subr.mxu0 0.0
    %411 = vmatpush1.msra.mxu0 0.0
    %412 = vmatprep.subr.mxu0 0.0
    %413 = vmatpush1.msra.mxu0 0.0
    %414 = vmatprep.subr.mxu0 0.0
    %415 = vmatpush1.msra.mxu0 0.0
    %416 = vmatprep.subr.mxu0 0.0
    %417 = vmatpush1.msra.mxu0 0.0
    %418 = vmatprep.subr.mxu0 0.0
    %419 = vmatpush1.msra.mxu0 %v173
    %420 = vmatprep.subr.mxu0 0.0
    %421 = vmatpush1.msra.mxu0 %v172
    %422 = vmatprep.subr.mxu0 0.0
    %423 = vmatpush1.msra.mxu0 %v171
    %424 = vmatprep.subr.mxu0 0.0
    %425 = vmatpush1.msra.mxu0 %v170
    %426 = vmatprep.subr.mxu0 0.0
    %427 = vmatpush2.msra.mxu0 0.0
    %428 = vmatprep.subr.mxu0 0.0
    %429 = vmatpush2.msra.mxu0 0.0
    %430 = vmatprep.subr.mxu0 0.0
    %431 = vmatpush2.msra.mxu0 0.0
    %432 = vmatprep.subr.mxu0 0.0
    %433 = vmatpush2.msra.mxu0 0.0
    %434 = vmatprep.subr.mxu0 0.0
    %435 = vmatpush2.msra.mxu0 0.0
    %436 = vmatprep.subr.mxu0 0.0
    %437 = vmatpush2.msra.mxu0 0.0
    %438 = vmatprep.subr.mxu0 0.0
    %439 = vmatpush2.msra.mxu0 0.0
    %440 = vmatprep.subr.mxu0 0.0
    %441 = vmatpush2.msra.mxu0 0.0
    %442 = vmatprep.subr.mxu0 0.0
    %443 = vmatpush2.msra.mxu0 0.0
    %444 = vmatprep.subr.mxu0 0.0
    %445 = vmatpush2.msra.mxu0 0.0
    %446 = vmatprep.subr.mxu0 0.0
    %447 = vmatpush2.msra.mxu0 0.0
    %448 = vmatprep.subr.mxu0 0.0
    %449 = vmatpush2.msra.mxu0 0.0
    %450 = vmatprep.subr.mxu0 0.0
    %451 = vmatpush2.msra.mxu0 0.0
    %452 = vmatprep.subr.mxu0 0.0
    %453 = vmatpush2.msra.mxu0 0.0
    %454 = vmatprep.subr.mxu0 0.0
    %455 = vmatpush2.msra.mxu0 0.0
    %456 = vmatprep.subr.mxu0 0.0
    %457 = vmatpush2.msra.mxu0 0.0
    %458 = vmatprep.mubr.f32.mxu0 0.0
    %459 = vmatmul.mubr.f32.gmra.mxu0 %v392
    %v460 = vpop.f32.mrf.mxu0
    %v461 = vadd.f32 0.0, %v460
    %v462 = vpop.f32.mrf.mxu0
    %463 = vdwg.mxu0
    %v465 = vrot.slane %v461, 4
    %v467 = vadd.f32 %v179, %v465
    %v468 = vmul.f32 %v467, 0.5
    %v469 = vtanh.pop %v468
    %v470 = vmul.f32 %v469, 0.5
    %v471 = vadd.f32 %v470, 0.5
    %v473 = vrot.slane %v381, 6
    %v475 = vmul.f32 %v471, %v473
    %v476 = vtanh.pop %v467
    %478 = vrot.lane.b32.xlu0 %v476, 64
    %v479 = vpop.permute.xlu0 %478
    %v481 = vmul.f32 %v471, %v479
    %483 = vrot.lane.b32.xlu0 %v481, 32
    %v484 = vpop.permute.xlu0 %483
    %v486 = vadd.f32 %v475, %v484
    %v487 = vtanh.pop %v486
    %489 = vrot.lane.b32.xlu0 %v487, 64
    %v490 = vpop.permute.xlu0 %489
    %v492 = vmul.f32 %v471, %v490
    %v494 = vrot.slane %v492, 4
    %495 = vrot.lane.b32.xlu0 %v494, 32
    %v496 = vpop.permute.xlu0 %495
    %v497 = vsel %vm180, %v496, 0
    %499 = vmatprep.subr.mxu0 0.0
    %500 = vmatpush1.msra.mxu0 0.0
    %501 = vmatprep.subr.mxu0 0.0
    %502 = vmatpush1.msra.mxu0 0.0
    %503 = vmatprep.subr.mxu0 0.0
    %504 = vmatpush1.msra.mxu0 0.0
    %505 = vmatprep.subr.mxu0 0.0
    %506 = vmatpush1.msra.mxu0 0.0
    %507 = vmatprep.subr.mxu0 0.0
    %508 = vmatpush1.msra.mxu0 0.0
    %509 = vmatprep.subr.mxu0 0.0
    %510 = vmatpush1.msra.mxu0 0.0
    %511 = vmatprep.subr.mxu0 0.0
    %512 = vmatpush1.msra.mxu0 0.0
    %513 = vmatprep.subr.mxu0 0.0
    %514 = vmatpush1.msra.mxu0 0.0
    %515 = vmatprep.subr.mxu0 0.0
    %516 = vmatpush1.msra.mxu0 0.0
    %517 = vmatprep.subr.mxu0 0.0
    %518 = vmatpush1.msra.mxu0 0.0
    %519 = vmatprep.subr.mxu0 0.0
    %520 = vmatpush1.msra.mxu0 0.0
    %521 = vmatprep.subr.mxu0 0.0
    %522 = vmatpush1.msra.mxu0 0.0
    %523 = vmatprep.subr.mxu0 0.0
    %524 = vmatpush1.msra.mxu0 %v173
    %525 = vmatprep.subr.mxu0 0.0
    %526 = vmatpush1.msra.mxu0 %v172
    %527 = vmatprep.subr.mxu0 0.0
    %528 = vmatpush1.msra.mxu0 %v171
    %529 = vmatprep.subr.mxu0 0.0
    %530 = vmatpush1.msra.mxu0 %v170
    %531 = vmatprep.subr.mxu0 0.0
    %532 = vmatpush2.msra.mxu0 0.0
    %533 = vmatprep.subr.mxu0 0.0
    %534 = vmatpush2.msra.mxu0 0.0
    %535 = vmatprep.subr.mxu0 0.0
    %536 = vmatpush2.msra.mxu0 0.0
    %537 = vmatprep.subr.mxu0 0.0
    %538 = vmatpush2.msra.mxu0 0.0
    %539 = vmatprep.subr.mxu0 0.0
    %540 = vmatpush2.msra.mxu0 0.0
    %541 = vmatprep.subr.mxu0 0.0
    %542 = vmatpush2.msra.mxu0 0.0
    %543 = vmatprep.subr.mxu0 0.0
    %544 = vmatpush2.msra.mxu0 0.0
    %545 = vmatprep.subr.mxu0 0.0
    %546 = vmatpush2.msra.mxu0 0.0
    %547 = vmatprep.subr.mxu0 0.0
    %548 = vmatpush2.msra.mxu0 0.0
    %549 = vmatprep.subr.mxu0 0.0
    %550 = vmatpush2.msra.mxu0 0.0
    %551 = vmatprep.subr.mxu0 0.0
    %552 = vmatpush2.msra.mxu0 0.0
    %553 = vmatprep.subr.mxu0 0.0
    %554 = vmatpush2.msra.mxu0 0.0
    %555 = vmatprep.subr.mxu0 0.0
    %556 = vmatpush2.msra.mxu0 0.0
    %557 = vmatprep.subr.mxu0 0.0
    %558 = vmatpush2.msra.mxu0 0.0
    %559 = vmatprep.subr.mxu0 0.0
    %560 = vmatpush2.msra.mxu0 0.0
    %561 = vmatprep.subr.mxu0 0.0
    %562 = vmatpush2.msra.mxu0 0.0
    %563 = vmatprep.mubr.f32.mxu0 0.0
    %564 = vmatmul.mubr.f32.gmra.mxu0 %v497
    %v565 = vpop.f32.mrf.mxu0
    %v566 = vadd.f32 0.0, %v565
    %v567 = vpop.f32.mrf.mxu0
    %568 = vdwg.mxu0
    %v570 = vrot.slane %v566, 2
    %v572 = vadd.f32 %v283, %v570
    %v573 = vmul.f32 %v572, 0.5
    %v574 = vtanh.pop %v573
    %v575 = vmul.f32 %v574, 0.5
    %v576 = vadd.f32 %v575, 0.5
    %v578 = vrot.slane %v486, 6
    %v580 = vmul.f32 %v576, %v578
    %v581 = vtanh.pop %v572
    %583 = vrot.lane.b32.xlu0 %v581, 64
    %v584 = vpop.permute.xlu0 %583
    %v586 = vmul.f32 %v576, %v584
    %588 = vrot.lane.b32.xlu0 %v586, 32
    %v589 = vpop.permute.xlu0 %588
    %v591 = vadd.f32 %v580, %v589
    %v592 = vtanh.pop %v591
    %594 = vrot.lane.b32.xlu0 %v592, 64
    %v595 = vpop.permute.xlu0 %594
    %v597 = vmul.f32 %v576, %v595
    %v599 = vrot.slane %v148, 6
    %v601 = vsel %vm168, %v153, %v599
    %v603 = vrot.slane %v597, 6
    %604 = vrot.lane.b32.xlu0 %v603, 32
    %v605 = vpop.permute.xlu0 %604
    %v606 = vsel %vm180, %v605, 0
    %608 = vmatprep.subr.mxu0 0.0
    %609 = vmatpush1.msra.mxu0 0.0
    %610 = vmatprep.subr.mxu0 0.0
    %611 = vmatpush1.msra.mxu0 0.0
    %612 = vmatprep.subr.mxu0 0.0
    %613 = vmatpush1.msra.mxu0 0.0
    %614 = vmatprep.subr.mxu0 0.0
    %615 = vmatpush1.msra.mxu0 0.0
    %616 = vmatprep.subr.mxu0 0.0
    %617 = vmatpush1.msra.mxu0 0.0
    %618 = vmatprep.subr.mxu0 0.0
    %619 = vmatpush1.msra.mxu0 0.0
    %620 = vmatprep.subr.mxu0 0.0
    %621 = vmatpush1.msra.mxu0 0.0
    %622 = vmatprep.subr.mxu0 0.0
    %623 = vmatpush1.msra.mxu0 0.0
    %624 = vmatprep.subr.mxu0 0.0
    %625 = vmatpush1.msra.mxu0 0.0
    %626 = vmatprep.subr.mxu0 0.0
    %627 = vmatpush1.msra.mxu0 0.0
    %628 = vmatprep.subr.mxu0 0.0
    %629 = vmatpush1.msra.mxu0 0.0
    %630 = vmatprep.subr.mxu0 0.0
    %631 = vmatpush1.msra.mxu0 0.0
    %632 = vmatprep.subr.mxu0 0.0
    %633 = vmatpush1.msra.mxu0 %v173
    %634 = vmatprep.subr.mxu0 0.0
    %635 = vmatpush1.msra.mxu0 %v172
    %636 = vmatprep.subr.mxu0 0.0
    %637 = vmatpush1.msra.mxu0 %v171
    %638 = vmatprep.subr.mxu0 0.0
    %639 = vmatpush1.msra.mxu0 %v170
    %640 = vmatprep.subr.mxu0 0.0
    %641 = vmatpush2.msra.mxu0 0.0
    %642 = vmatprep.subr.mxu0 0.0
    %643 = vmatpush2.msra.mxu0 0.0
    %644 = vmatprep.subr.mxu0 0.0
    %645 = vmatpush2.msra.mxu0 0.0
    %646 = vmatprep.subr.mxu0 0.0
    %647 = vmatpush2.msra.mxu0 0.0
    %648 = vmatprep.subr.mxu0 0.0
    %649 = vmatpush2.msra.mxu0 0.0
    %650 = vmatprep.subr.mxu0 0.0
    %651 = vmatpush2.msra.mxu0 0.0
    %652 = vmatprep.subr.mxu0 0.0
    %653 = vmatpush2.msra.mxu0 0.0
    %654 = vmatprep.subr.mxu0 0.0
    %655 = vmatpush2.msra.mxu0 0.0
    %656 = vmatprep.subr.mxu0 0.0
    %657 = vmatpush2.msra.mxu0 0.0
    %658 = vmatprep.subr.mxu0 0.0
    %659 = vmatpush2.msra.mxu0 0.0
    %660 = vmatprep.subr.mxu0 0.0
    %661 = vmatpush2.msra.mxu0 0.0
    %662 = vmatprep.subr.mxu0 0.0
    %663 = vmatpush2.msra.mxu0 0.0
    %664 = vmatprep.subr.mxu0 0.0
    %665 = vmatpush2.msra.mxu0 0.0
    %666 = vmatprep.subr.mxu0 0.0
    %667 = vmatpush2.msra.mxu0 0.0
    %668 = vmatprep.subr.mxu0 0.0
    %669 = vmatpush2.msra.mxu0 0.0
    %670 = vmatprep.subr.mxu0 0.0
    %671 = vmatpush2.msra.mxu0 0.0
    %672 = vmatprep.mubr.f32.mxu0 0.0
    %673 = vmatmul.mubr.f32.gmra.mxu0 %v606
    %v674 = vpop.f32.mrf.mxu0
    %v675 = vadd.f32 0.0, %v674
    %v676 = vpop.f32.mrf.mxu0
    %677 = vdwg.mxu0
    %v678 = vadd.f32 %v601, %v675
    %v679 = vmul.f32 %v678, 0.5
    %v680 = vtanh.pop %v679
    %v681 = vmul.f32 %v680, 0.5
    %v682 = vadd.f32 %v681, 0.5
    %v684 = vrot.slane %v591, 6
    %v686 = vmul.f32 %v682, %v684
    %v687 = vtanh.pop %v678
    %689 = vrot.lane.b32.xlu0 %v687, 64
    %v690 = vpop.permute.xlu0 %689
    %v692 = vmul.f32 %v682, %v690
    %694 = vrot.lane.b32.xlu0 %v692, 32
    %v695 = vpop.permute.xlu0 %694
    %v697 = vadd.f32 %v686, %v695
    %v698 = vtanh.pop %v697
    %700 = vrot.lane.b32.xlu0 %v698, 64
    %v701 = vpop.permute.xlu0 %700
    %v703 = vmul.f32 %v682, %v701
    %v704 = vrot.slane %v148, 2
    %v706 = vsel %vm168, %v153, %v704
    %708 = vrot.lane.b32.xlu0 %v703, 32
    %v709 = vpop.permute.xlu0 %708
    %v710 = vsel %vm180, %v709, 0
    %712 = vmatprep.subr.mxu0 0.0
    %713 = vmatpush1.msra.mxu0 0.0
    %714 = vmatprep.subr.mxu0 0.0
    %715 = vmatpush1.msra.mxu0 0.0
    %716 = vmatprep.subr.mxu0 0.0
    %717 = vmatpush1.msra.mxu0 0.0
    %718 = vmatprep.subr.mxu0 0.0
    %719 = vmatpush1.msra.mxu0 0.0
    %720 = vmatprep.subr.mxu0 0.0
    %721 = vmatpush1.msra.mxu0 0.0
    %722 = vmatprep.subr.mxu0 0.0
    %723 = vmatpush1.msra.mxu0 0.0
    %724 = vmatprep.subr.mxu0 0.0
    %725 = vmatpush1.msra.mxu0 0.0
    %726 = vmatprep.subr.mxu0 0.0
    %727 = vmatpush1.msra.mxu0 0.0
    %728 = vmatprep.subr.mxu0 0.0
    %729 = vmatpush1.msra.mxu0 0.0
    %730 = vmatprep.subr.mxu0 0.0
    %731 = vmatpush1.msra.mxu0 0.0
    %732 = vmatprep.subr.mxu0 0.0
    %733 = vmatpush1.msra.mxu0 0.0
    %734 = vmatprep.subr.mxu0 0.0
    %735 = vmatpush1.msra.mxu0 0.0
    %736 = vmatprep.subr.mxu0 0.0
    %737 = vmatpush1.msra.mxu0 %v173
    %738 = vmatprep.subr.mxu0 0.0
    %739 = vmatpush1.msra.mxu0 %v172
    %740 = vmatprep.subr.mxu0 0.0
    %741 = vmatpush1.msra.mxu0 %v171
    %742 = vmatprep.subr.mxu0 0.0
    %743 = vmatpush1.msra.mxu0 %v170
    %744 = vmatprep.subr.mxu0 0.0
    %745 = vmatpush2.msra.mxu0 0.0
    %746 = vmatprep.subr.mxu0 0.0
    %747 = vmatpush2.msra.mxu0 0.0
    %748 = vmatprep.subr.mxu0 0.0
    %749 = vmatpush2.msra.mxu0 0.0
    %750 = vmatprep.subr.mxu0 0.0
    %751 = vmatpush2.msra.mxu0 0.0
    %752 = vmatprep.subr.mxu0 0.0
    %753 = vmatpush2.msra.mxu0 0.0
    %754 = vmatprep.subr.mxu0 0.0
    %755 = vmatpush2.msra.mxu0 0.0
    %756 = vmatprep.subr.mxu0 0.0
    %757 = vmatpush2.msra.mxu0 0.0
    %758 = vmatprep.subr.mxu0 0.0
    %759 = vmatpush2.msra.mxu0 0.0
    %760 = vmatprep.subr.mxu0 0.0
    %761 = vmatpush2.msra.mxu0 0.0
    %762 = vmatprep.subr.mxu0 0.0
    %763 = vmatpush2.msra.mxu0 0.0
    %764 = vmatprep.subr.mxu0 0.0
    %765 = vmatpush2.msra.mxu0 0.0
    %766 = vmatprep.subr.mxu0 0.0
    %767 = vmatpush2.msra.mxu0 0.0
    %768 = vmatprep.subr.mxu0 0.0
    %769 = vmatpush2.msra.mxu0 0.0
    %770 = vmatprep.subr.mxu0 0.0
    %771 = vmatpush2.msra.mxu0 0.0
    %772 = vmatprep.subr.mxu0 0.0
    %773 = vmatpush2.msra.mxu0 0.0
    %774 = vmatprep.subr.mxu0 0.0
    %775 = vmatpush2.msra.mxu0 0.0
    %776 = vmatprep.mubr.f32.mxu0 0.0
    %777 = vmatmul.mubr.f32.gmra.mxu0 %v710
    %v778 = vpop.f32.mrf.mxu0
    %v779 = vadd.f32 0.0, %v778
    %v780 = vpop.f32.mrf.mxu0
    %781 = vdwg.mxu0
    %v783 = vrot.slane %v779, 6
    %v785 = vadd.f32 %v706, %v783
    %v786 = vmul.f32 %v785, 0.5
    %v787 = vtanh.pop %v786
    %v788 = vmul.f32 %v787, 0.5
    %v789 = vadd.f32 %v788, 0.5
    %v791 = vrot.slane %v697, 6
    %v793 = vmul.f32 %v789, %v791
    %v794 = vtanh.pop %v785
    %796 = vrot.lane.b32.xlu0 %v794, 64
    %v797 = vpop.permute.xlu0 %796
    %v799 = vmul.f32 %v789, %v797
    %801 = vrot.lane.b32.xlu0 %v799, 32
    %v802 = vpop.permute.xlu0 %801
    %v804 = vadd.f32 %v793, %v802
    %v805 = vtanh.pop %v804
    %807 = vrot.lane.b32.xlu0 %v805, 64
    %v808 = vpop.permute.xlu0 %807
    %v810 = vmul.f32 %v789, %v808
    %v812 = vrot.slane %v810, 2
    %813 = vrot.lane.b32.xlu0 %v812, 32
    %v814 = vpop.permute.xlu0 %813
    %v815 = vsel %vm180, %v814, 0
    %817 = vmatprep.subr.mxu0 0.0
    %818 = vmatpush1.msra.mxu0 0.0
    %819 = vmatprep.subr.mxu0 0.0
    %820 = vmatpush1.msra.mxu0 0.0
    %821 = vmatprep.subr.mxu0 0.0
    %822 = vmatpush1.msra.mxu0 0.0
    %823 = vmatprep.subr.mxu0 0.0
    %824 = vmatpush1.msra.mxu0 0.0
    %825 = vmatprep.subr.mxu0 0.0
    %826 = vmatpush1.msra.mxu0 0.0
    %827 = vmatprep.subr.mxu0 0.0
    %828 = vmatpush1.msra.mxu0 0.0
    %829 = vmatprep.subr.mxu0 0.0
    %830 = vmatpush1.msra.mxu0 0.0
    %831 = vmatprep.subr.mxu0 0.0
    %832 = vmatpush1.msra.mxu0 0.0
    %833 = vmatprep.subr.mxu0 0.0
    %834 = vmatpush1.msra.mxu0 0.0
    %835 = vmatprep.subr.mxu0 0.0
    %836 = vmatpush1.msra.mxu0 0.0
    %837 = vmatprep.subr.mxu0 0.0
    %838 = vmatpush1.msra.mxu0 0.0
    %839 = vmatprep.subr.mxu0 0.0
    %840 = vmatpush1.msra.mxu0 0.0
    %841 = vmatprep.subr.mxu0 0.0
    %842 = vmatpush1.msra.mxu0 %v173
    %843 = vmatprep.subr.mxu0 0.0
    %844 = vmatpush1.msra.mxu0 %v172
    %845 = vmatprep.subr.mxu0 0.0
    %846 = vmatpush1.msra.mxu0 %v171
    %847 = vmatprep.subr.mxu0 0.0
    %848 = vmatpush1.msra.mxu0 %v170
    %849 = vmatprep.subr.mxu0 0.0
    %850 = vmatpush2.msra.mxu0 0.0
    %851 = vmatprep.subr.mxu0 0.0
    %852 = vmatpush2.msra.mxu0 0.0
    %853 = vmatprep.subr.mxu0 0.0
    %854 = vmatpush2.msra.mxu0 0.0
    %855 = vmatprep.subr.mxu0 0.0
    %856 = vmatpush2.msra.mxu0 0.0
    %857 = vmatprep.subr.mxu0 0.0
    %858 = vmatpush2.msra.mxu0 0.0
    %859 = vmatprep.subr.mxu0 0.0
    %860 = vmatpush2.msra.mxu0 0.0
    %861 = vmatprep.subr.mxu0 0.0
    %862 = vmatpush2.msra.mxu0 0.0
    %863 = vmatprep.subr.mxu0 0.0
    %864 = vmatpush2.msra.mxu0 0.0
    %865 = vmatprep.subr.mxu0 0.0
    %866 = vmatpush2.msra.mxu0 0.0
    %867 = vmatprep.subr.mxu0 0.0
    %868 = vmatpush2.msra.mxu0 0.0
    %869 = vmatprep.subr.mxu0 0.0
    %870 = vmatpush2.msra.mxu0 0.0
    %871 = vmatprep.subr.mxu0 0.0
    %872 = vmatpush2.msra.mxu0 0.0
    %873 = vmatprep.subr.mxu0 0.0
    %874 = vmatpush2.msra.mxu0 0.0
    %875 = vmatprep.subr.mxu0 0.0
    %876 = vmatpush2.msra.mxu0 0.0
    %877 = vmatprep.subr.mxu0 0.0
    %878 = vmatpush2.msra.mxu0 0.0
    %879 = vmatprep.subr.mxu0 0.0
    %880 = vmatpush2.msra.mxu0 0.0
    %881 = vmatprep.mubr.f32.mxu0 0.0
    %882 = vmatmul.mubr.f32.gmra.mxu0 %v815
    %v883 = vpop.f32.mrf.mxu0
    %v884 = vadd.f32 0.0, %v883
    %v885 = vpop.f32.mrf.mxu0
    %886 = vdwg.mxu0
    %v888 = vrot.slane %v884, 4
    %v890 = vadd.f32 %v601, %v888
    %v891 = vmul.f32 %v890, 0.5
    %v892 = vtanh.pop %v891
    %v893 = vmul.f32 %v892, 0.5
    %v894 = vadd.f32 %v893, 0.5
    %v896 = vrot.slane %v804, 6
    %v898 = vmul.f32 %v894, %v896
    %v899 = vtanh.pop %v890
    %901 = vrot.lane.b32.xlu0 %v899, 64
    %v902 = vpop.permute.xlu0 %901
    %v904 = vmul.f32 %v894, %v902
    %906 = vrot.lane.b32.xlu0 %v904, 32
    %v907 = vpop.permute.xlu0 %906
    %v909 = vadd.f32 %v898, %v907
    %v910 = vtanh.pop %v909
    %912 = vrot.lane.b32.xlu0 %v910, 64
    %v913 = vpop.permute.xlu0 %912
    %v915 = vmul.f32 %v894, %v913
    %v917 = vrot.slane %v915, 4
    %918 = vrot.lane.b32.xlu0 %v917, 32
    %v919 = vpop.permute.xlu0 %918
    %v920 = vsel %vm180, %v919, 0
    %922 = vmatprep.subr.mxu0 0.0
    %923 = vmatpush1.msra.mxu0 0.0
    %924 = vmatprep.subr.mxu0 0.0
    %925 = vmatpush1.msra.mxu0 0.0
    %926 = vmatprep.subr.mxu0 0.0
    %927 = vmatpush1.msra.mxu0 0.0
    %928 = vmatprep.subr.mxu0 0.0
    %929 = vmatpush1.msra.mxu0 0.0
    %930 = vmatprep.subr.mxu0 0.0
    %931 = vmatpush1.msra.mxu0 0.0
    %932 = vmatprep.subr.mxu0 0.0
    %933 = vmatpush1.msra.mxu0 0.0
    %934 = vmatprep.subr.mxu0 0.0
    %935 = vmatpush1.msra.mxu0 0.0
    %936 = vmatprep.subr.mxu0 0.0
    %937 = vmatpush1.msra.mxu0 0.0
    %938 = vmatprep.subr.mxu0 0.0
    %939 = vmatpush1.msra.mxu0 0.0
    %940 = vmatprep.subr.mxu0 0.0
    %941 = vmatpush1.msra.mxu0 0.0
    %942 = vmatprep.subr.mxu0 0.0
    %943 = vmatpush1.msra.mxu0 0.0
    %944 = vmatprep.subr.mxu0 0.0
    %945 = vmatpush1.msra.mxu0 0.0
    %946 = vmatprep.subr.mxu0 0.0
    %947 = vmatpush1.msra.mxu0 %v173
    %948 = vmatprep.subr.mxu0 0.0
    %949 = vmatpush1.msra.mxu0 %v172
    %950 = vmatprep.subr.mxu0 0.0
    %951 = vmatpush1.msra.mxu0 %v171
    %952 = vmatprep.subr.mxu0 0.0
    %953 = vmatpush1.msra.mxu0 %v170
    %954 = vmatprep.subr.mxu0 0.0
    %955 = vmatpush2.msra.mxu0 0.0
    %956 = vmatprep.subr.mxu0 0.0
    %957 = vmatpush2.msra.mxu0 0.0
    %958 = vmatprep.subr.mxu0 0.0
    %959 = vmatpush2.msra.mxu0 0.0
    %960 = vmatprep.subr.mxu0 0.0
    %961 = vmatpush2.msra.mxu0 0.0
    %962 = vmatprep.subr.mxu0 0.0
    %963 = vmatpush2.msra.mxu0 0.0
    %964 = vmatprep.subr.mxu0 0.0
    %965 = vmatpush2.msra.mxu0 0.0
    %966 = vmatprep.subr.mxu0 0.0
    %967 = vmatpush2.msra.mxu0 0.0
    %968 = vmatprep.subr.mxu0 0.0
    %969 = vmatpush2.msra.mxu0 0.0
    %970 = vmatprep.subr.mxu0 0.0
    %971 = vmatpush2.msra.mxu0 0.0
    %972 = vmatprep.subr.mxu0 0.0
    %973 = vmatpush2.msra.mxu0 0.0
    %974 = vmatprep.subr.mxu0 0.0
    %975 = vmatpush2.msra.mxu0 0.0
    %976 = vmatprep.subr.mxu0 0.0
    %977 = vmatpush2.msra.mxu0 0.0
    %978 = vmatprep.subr.mxu0 0.0
    %979 = vmatpush2.msra.mxu0 0.0
    %980 = vmatprep.subr.mxu0 0.0
    %981 = vmatpush2.msra.mxu0 0.0
    %982 = vmatprep.subr.mxu0 0.0
    %983 = vmatpush2.msra.mxu0 0.0
    %984 = vmatprep.subr.mxu0 0.0
    %985 = vmatpush2.msra.mxu0 0.0
    %986 = vmatprep.mubr.f32.mxu0 0.0
    %987 = vmatmul.mubr.f32.gmra.mxu0 %v920
    %v988 = vpop.f32.mrf.mxu0
    %v989 = vadd.f32 0.0, %v988
    %v990 = vpop.f32.mrf.mxu0
    %991 = vdwg.mxu0
    %v993 = vrot.slane %v989, 2
    %v995 = vadd.f32 %v706, %v993
    %v996 = vmul.f32 %v995, 0.5
    %v997 = vtanh.pop %v996
    %v998 = vmul.f32 %v997, 0.5
    %v999 = vadd.f32 %v998, 0.5
    %v1001 = vrot.slane %v909, 6
    %v1003 = vmul.f32 %v999, %v1001
    %v1004 = vtanh.pop %v995
    %1006 = vrot.lane.b32.xlu0 %v1004, 64
    %v1007 = vpop.permute.xlu0 %1006
    %v1009 = vmul.f32 %v999, %v1007
    %1011 = vrot.lane.b32.xlu0 %v1009, 32
    %v1012 = vpop.permute.xlu0 %1011
    %v1014 = vadd.f32 %v1003, %v1012
    %v1015 = vtanh.pop %v1014
    %1017 = vrot.lane.b32.xlu0 %v1015, 64
    %v1018 = vpop.permute.xlu0 %1017
    %v1020 = vmul.f32 %v999, %v1018
    %v1023 = vrot.slane %v1020, 6
    %1024 = vrot.lane.b32.xlu0 %v1023, 32
    %v1025 = vpop.permute.xlu0 %1024
    %v1027 = vsel %vm169, %v286, %v1025
    %v1030 = vsel %vm169, %v391, %v919
    %v1033 = vsel %vm169, %v496, %v814
    %v1036 = vsel %vm169, %v605, %v709
    %v1037 = vsel %vm169, %v709, %v605
    %v1038 = vsel %vm169, %v814, %v496
    %v1039 = vsel %vm169, %v919, %v391
    %v1040 = vsel %vm169, %v1025, %v286
    %v1042 = vrot.slane %v1030, 6
    %v1045 = vrot.slane %v1033, 4
    %v1048 = vrot.slane %v1036, 2
    %v1051 = vrot.slane %v1038, 6
    %v1054 = vrot.slane %v1039, 4
    %v1057 = vrot.slane %v1040, 2
    %vm1059 = vcmask 1041408
    %v1060 = vsel %vm1059, %v1027, %v1042
    %vm1061 = vcmask 1043456
    %v1062 = vsel %vm1061, %v1060, %v1045
    %v1063 = vsel %vm77, %v1062, %v1048
    %v1064 = vsel %vm1059, %v1037, %v1051
    %v1065 = vsel %vm1061, %v1064, %v1054
    %v1066 = vsel %vm77, %v1065, %v1057
    %v1067 = vld [vmem:[%s6] sm:$0xff]
    %v1068 = vld [vmem:[%s6 + $0x8] sm:$0xff]
    %v1069 = vld [vmem:[%s6 + $0x10] sm:$0xff]
    %v1070 = vld [vmem:[%s6 + $0x18] sm:$0xff]
    %v1071 = vld [vmem:[%s7] sm:$0x1]
    %v1073 = vlaneseq
    %v1074 = vshrl.u32 %v1073, 7
    %v1075 = vsub.s32 0, %v1074
    %v1076 = vrot.slane %v1071, %v1075
    %v1079 = vsel %vm180, %v1063, 0
    %v1082 = vsel %vm180, %v1066, 0
    %1084 = vmatprep.subr.mxu0 0.0
    %1085 = vmatpush1.msra.mxu0 0.0
    %1086 = vmatprep.subr.mxu0 0.0
    %1087 = vmatpush1.msra.mxu0 0.0
    %1088 = vmatprep.subr.mxu0 0.0
    %1089 = vmatpush1.msra.mxu0 0.0
    %1090 = vmatprep.subr.mxu0 0.0
    %1091 = vmatpush1.msra.mxu0 0.0
    %1092 = vmatprep.subr.mxu0 0.0
    %1093 = vmatpush1.msra.mxu0 0.0
    %1094 = vmatprep.subr.mxu0 0.0
    %1095 = vmatpush1.msra.mxu0 0.0
    %1096 = vmatprep.subr.mxu0 0.0
    %1097 = vmatpush1.msra.mxu0 0.0
    %1098 = vmatprep.subr.mxu0 0.0
    %1099 = vmatpush1.msra.mxu0 0.0
    %1100 = vmatprep.subr.mxu0 0.0
    %1101 = vmatpush1.msra.mxu0 0.0
    %1102 = vmatprep.subr.mxu0 0.0
    %1103 = vmatpush1.msra.mxu0 0.0
    %1104 = vmatprep.subr.mxu0 0.0
    %1105 = vmatpush1.msra.mxu0 0.0
    %1106 = vmatprep.subr.mxu0 0.0
    %1107 = vmatpush1.msra.mxu0 0.0
    %1108 = vmatprep.subr.mxu0 0.0
    %1109 = vmatpush1.msra.mxu0 %v1070
    %1110 = vmatprep.subr.mxu0 0.0
    %1111 = vmatpush1.msra.mxu0 %v1069
    %1112 = vmatprep.subr.mxu0 0.0
    %1113 = vmatpush1.msra.mxu0 %v1068
    %1114 = vmatprep.subr.mxu0 0.0
    %1115 = vmatpush1.msra.mxu0 %v1067
    %1116 = vmatprep.subr.mxu0 0.0
    %1117 = vmatpush2.msra.mxu0 0.0
    %1118 = vmatprep.subr.mxu0 0.0
    %1119 = vmatpush2.msra.mxu0 0.0
    %1120 = vmatprep.subr.mxu0 0.0
    %1121 = vmatpush2.msra.mxu0 0.0
    %1122 = vmatprep.subr.mxu0 0.0
    %1123 = vmatpush2.msra.mxu0 0.0
    %1124 = vmatprep.subr.mxu0 0.0
    %1125 = vmatpush2.msra.mxu0 0.0
    %1126 = vmatprep.subr.mxu0 0.0
    %1127 = vmatpush2.msra.mxu0 0.0
    %1128 = vmatprep.subr.mxu0 0.0
    %1129 = vmatpush2.msra.mxu0 0.0
    %1130 = vmatprep.subr.mxu0 0.0
    %1131 = vmatpush2.msra.mxu0 0.0
    %1132 = vmatprep.subr.mxu0 0.0
    %1133 = vmatpush2.msra.mxu0 0.0
    %1134 = vmatprep.subr.mxu0 0.0
    %1135 = vmatpush2.msra.mxu0 0.0
    %1136 = vmatprep.subr.mxu0 0.0
    %1137 = vmatpush2.msra.mxu0 0.0
    %1138 = vmatprep.subr.mxu0 0.0
    %1139 = vmatpush2.msra.mxu0 0.0
    %1140 = vmatprep.subr.mxu0 0.0
    %1141 = vmatpush2.msra.mxu0 0.0
    %1142 = vmatprep.subr.mxu0 0.0
    %1143 = vmatpush2.msra.mxu0 0.0
    %1144 = vmatprep.subr.mxu0 0.0
    %1145 = vmatpush2.msra.mxu0 0.0
    %1146 = vmatprep.subr.mxu0 0.0
    %1147 = vmatpush2.msra.mxu0 0.0
    %1148 = vmatprep.mubr.f32.mxu0 0.0
    %1149 = vmatmul.mubr.f32.gmra.mxu0 %v1079
    %v1150 = vpop.f32.mrf.mxu0
    %v1151 = vadd.f32 %v1076, %v1150
    %v1152 = vpop.f32.mrf.mxu0
    %1153 = vmatprep.mubr.f32.mxu0 0.0
    %1154 = vmatmul.mubr.f32.gmra.mxu0 %v1082
    %v1155 = vpop.f32.mrf.mxu0
    %v1156 = vadd.f32 %v1076, %v1155
    %v1157 = vpop.f32.mrf.mxu0
    %1158 = vdwg.mxu0
    %vm1159 = vcmask 39936
    %1160 = vst.msk [vmem:[%s8] sm:$0xff] %vm1159, %v1151
    %1161 = vst.msk [vmem:[%s8 + $0x8] sm:$0xff] %vm1159, %v1156
    // Predicated region
    $region38: #{tpu_custom_call.1} parent=1 // pred_check
      _
    $region39: #{tpu_custom_call.1} parent=1 // pred_check_branch
      %1163 = sbr.rel (0) target = $region41
    $region40: #{tpu_custom_call.1} parent=1 // pred_region
      _
    $region41: #{tpu_custom_call.1} parent=1 // pred_fallthru
      _
    // Predicated region
    $region42: #{tpu_custom_call.1} parent=1 // pred_check
      _
    $region43: #{tpu_custom_call.1} parent=1 // pred_check_branch
      %1165 = sbr.rel (0) target = $region45
    $region44: #{tpu_custom_call.1} parent=1 // pred_region
      _
    $region45: #{tpu_custom_call.1} parent=1 // pred_fallthru
      _
    %1166 = vsyncpa [#allocation3], 1

</llo_original>
